<compile_context>
chip_gen: v7x
topology: tpu7x:2x2x1
jax: 0.10.0
libtpu: 0.0.40
codegen_flags: <defaults>
</compile_context>

<pallas_src>
import math

import jax
import jax.numpy as jnp
from jax.experimental import pallas as pl
from jax.experimental.pallas import tpu as pltpu

# ---- model hyper-params (small but lane-aligned: multiples of 128) ----
D_MODEL = 128
D_FF = 512
INV_SQRT2 = 1.0 / math.sqrt(2.0)

# Abramowitz & Stegun 7.1.26 erf polynomial (|err| <= 1.5e-7), with the
# 1/sqrt(2) argument scale folded into p so we never materialize x/sqrt(2).
_P_SCALED = 0.3275911 * INV_SQRT2
_A1, _A2, _A3, _A4, _A5 = (0.254829592, -0.284496736, 1.421413741,
                           -1.453152027, 1.061405429)


def _gelu_exact(x):
    """gelu(x) = 0.5*x*(1+erf(x/sqrt2)) == 0.5*(x + |x|*erf(|x|/sqrt2)).

    Identity removes the compare+select; divide goes to the EUP via
    pl.reciprocal(approx=True); exp(-(x/sqrt2)^2) == exp(-0.5*x*x).
    Only valid inside a Pallas kernel (uses pl.reciprocal).
    """
    ax = jnp.abs(x)
    t = pl.reciprocal(1.0 + _P_SCALED * ax, approx=True)
    poly = ((((_A5 * t + _A4) * t + _A3) * t + _A2) * t + _A1) * t
    erf_abs = 1.0 - poly * jnp.exp(-0.5 * x * x)          # erf(|x|/sqrt(2))
    return 0.5 * (x + ax * erf_abs)


def ffn_kernel(x_ref, w1_ref, b1_ref, w2_ref, b2_ref, o_ref):
    # fc1: bf16 MXU matmul, f32 accumulation.
    h = jnp.dot(x_ref[...], w1_ref[...],
                preferred_element_type=jnp.float32) + b1_ref[...]   # (tm, d_ff) f32
    g = _gelu_exact(h)                                              # f32 elementwise
    # fc2: cast activation back to bf16 for the MXU, accumulate in f32.
    o_ref[...] = (jnp.dot(g.astype(w2_ref.dtype), w2_ref[...],
                          preferred_element_type=jnp.float32)
                  + b2_ref[...]).astype(o_ref.dtype)                # (tm, d_model)


def _pick_tm(m_rows, pref=256):
    """Row tile: big (<=256) to fill the MXU M dim, multiple of 8, and small
    enough that the 1-D parallel grid has >= 2 steps (dual-TC v7x)."""
    m8 = ((m_rows + 7) // 8) * 8
    tm = min(pref, m8)
    if m8 // tm < 2 and m8 >= 16:
        tm = max(8, ((m8 // 2) // 8) * 8)
    return tm


def _resident_spec(shape, single_buffer):
    """Constant-index (resident) operand; single-buffered when supported."""
    idx_map = lambda i: (0,) * len(shape)
    if single_buffer and hasattr(pl, "Buffered"):
        try:
            return pl.BlockSpec(shape, idx_map, pipeline_mode=pl.Buffered(1))
        except TypeError:
            pass
    return pl.BlockSpec(shape, idx_map)


def _build_call(Mp, tm, D, Dff, single_buffer_weights):
    flops = 4 * Mp * D * Dff + 10 * Mp * Dff
    bytes_accessed = (2 * (Mp * D + D * Dff + Dff * D)      # bf16 x, W1, W2
                      + 4 * (Dff + D + Mp * D))             # f32 biases + output
    return pl.pallas_call(
        ffn_kernel,
        out_shape=jax.ShapeDtypeStruct((Mp, D), jnp.float32),
        grid=(Mp // tm,),
        in_specs=[
            pl.BlockSpec((tm, D), lambda i: (i, 0)),                 # x rows
            _resident_spec((D, Dff), single_buffer_weights),         # W1
            _resident_spec((1, Dff), single_buffer_weights),         # b1
            _resident_spec((Dff, D), single_buffer_weights),         # W2
            _resident_spec((1, D), single_buffer_weights),           # b2
        ],
        out_specs=pl.BlockSpec((tm, D), lambda i: (i, 0)),
        compiler_params=pltpu.CompilerParams(
            dimension_semantics=("parallel",),
            vmem_limit_bytes=48 * 1024 * 1024),
        cost_estimate=pl.CostEstimate(
            flops=flops,
            transcendentals=2 * Mp * Dff,   # one exp + one approx-recip per gelu elem
            bytes_accessed=bytes_accessed),
    )


def poswise_ffn(x, w1, b1, w2, b2, *, tm=256):
    """x: (B, S, d_model); w1: (d_model, d_ff); w2: (d_ff, d_model)."""
    B, S, D = x.shape
    Dff = w1.shape[1]
    M = B * S

    tm = _pick_tm(M, tm)
    Mp = pl.cdiv(M, tm) * tm

    # Lane-dense 2D slab; pad rows up to the row tile (layout plumbing is free
    # in the wrapper).
    x2 = x.reshape(M, D).astype(jnp.float32)
    if Mp != M:
        x2 = jnp.pad(x2, ((0, Mp - M), (0, 0)))
    x2 = x2.astype(jnp.bfloat16)

    w1b = w1.astype(jnp.bfloat16)
    w2b = w2.astype(jnp.bfloat16)
    b1_2 = b1.reshape(1, Dff).astype(jnp.float32)
    b2_2 = b2.reshape(1, D).astype(jnp.float32)
    args = (x2, w1b, b1_2, w2b, b2_2)

    try:
        out2 = _build_call(Mp, tm, D, Dff, single_buffer_weights=True)(*args)
    except Exception:
        # Fallback if this jax/Mosaic build rejects pipeline_mode=pl.Buffered(1).
        out2 = _build_call(Mp, tm, D, Dff, single_buffer_weights=False)(*args)

    return out2[:M].reshape(B, S, D)


if __name__ == "__main__":
    key = jax.random.PRNGKey(0)
    k1, k2, k3, k4, kx = jax.random.split(key, 5)

    B, S = 2, 8
    w1 = jax.random.normal(k1, (D_MODEL, D_FF), jnp.float32) / math.sqrt(D_MODEL)
    b1 = jax.random.normal(k2, (D_FF,), jnp.float32) * 0.1
    w2 = jax.random.normal(k3, (D_FF, D_MODEL), jnp.float32) / math.sqrt(D_FF)
    b2 = jax.random.normal(k4, (D_MODEL,), jnp.float32) * 0.1
    x = jax.random.normal(kx, (B, S, D_MODEL), jnp.float32)

    out = jax.block_until_ready(poswise_ffn(x, w1, b1, w2, b2))

    # pure-JAX reference: exact erf-based gelu, full-f32 matmuls.
    hp = jax.lax.Precision.HIGHEST
    x2 = x.reshape(B * S, D_MODEL)
    h = jnp.dot(x2, w1, precision=hp) + b1
    g = h * 0.5 * (1.0 + jax.lax.erf(h * jnp.float32(INV_SQRT2)))
    ref = (jnp.dot(g, w2, precision=hp) + b2).reshape(B, S, D_MODEL)

    assert out.shape == (B, S, D_MODEL)
    err = float(jnp.max(jnp.abs(out - ref)))
    # Tolerance relaxed vs. the f32-HIGHEST reference because the kernel feeds
    # the MXU bf16 inputs (f32 accumulation) and uses the EUP approx reciprocal.
    assert err < 5e-2, err

    print("KERNEL_OK")
</pallas_src>

<mosaic_0001>
module attributes {stable_mosaic.version = 11 : i64} {
  func.func @ffn_kernel(%arg0: i32, %arg1: memref<8x128xbf16, #tpu.memory_space<vmem>>, %arg2: memref<128x512xbf16, #tpu.memory_space<vmem>>, %arg3: memref<1x512xf32, #tpu.memory_space<vmem>>, %arg4: memref<512x128xbf16, #tpu.memory_space<vmem>>, %arg5: memref<1x128xf32, #tpu.memory_space<vmem>>, %arg6: memref<8x128xf32, #tpu.memory_space<vmem>>) attributes {dimension_semantics = [#tpu.dimension_semantics<parallel>], iteration_bounds = array<i64: 2>, scalar_prefetch = 0 : i64, scratch_operands = 0 : i64, tpu.core_type = #tpu.core_type<tc>, window_params = [{transform_indices = @transform_0, window_bounds = array<i64: 8, 128>}, {pipeline_mode = #tpu.pipeline_mode<synchronous>, transform_indices = @transform_1, window_bounds = array<i64: 128, 512>}, {pipeline_mode = #tpu.pipeline_mode<synchronous>, transform_indices = @transform_2, window_bounds = array<i64: 1, 512>}, {pipeline_mode = #tpu.pipeline_mode<synchronous>, transform_indices = @transform_3, window_bounds = array<i64: 512, 128>}, {pipeline_mode = #tpu.pipeline_mode<synchronous>, transform_indices = @transform_4, window_bounds = array<i64: 1, 128>}, {transform_indices = @transform_5, window_bounds = array<i64: 8, 128>}]} {
    %c0 = arith.constant 0 : index
    %c0_0 = arith.constant 0 : index
    %0 = vector.load %arg1[%c0, %c0_0] : memref<8x128xbf16, #tpu.memory_space<vmem>>, vector<8x128xbf16>
    %c0_1 = arith.constant 0 : index
    %c0_2 = arith.constant 0 : index
    %1 = vector.load %arg2[%c0_1, %c0_2] : memref<128x512xbf16, #tpu.memory_space<vmem>>, vector<128x512xbf16>
    %cst = arith.constant dense<0.000000e+00> : vector<8x512xf32>
    %2 = tpu.matmul %0, %1, %cst {dimension_numbers = #tpu.dot_dimension_numbers<[1], [0], [0], [1], [0, 0, 1, 1], [], []>} : vector<8x128xbf16>, vector<128x512xbf16>, vector<8x512xf32> -> vector<8x512xf32>
    %c0_3 = arith.constant 0 : index
    %c0_4 = arith.constant 0 : index
    %3 = vector.load %arg3[%c0_3, %c0_4] : memref<1x512xf32, #tpu.memory_space<vmem>>, vector<1x512xf32>
    %4 = vector.broadcast %3 : vector<1x512xf32> to vector<8x512xf32>
    %5 = arith.addf %2, %4 : vector<8x512xf32>
    %6 = math.absf %5 : vector<8x512xf32>
    %cst_5 = arith.constant 0.231641889 : f32
    %7 = vector.broadcast %cst_5 : f32 to vector<8x512xf32>
    %8 = arith.mulf %7, %6 : vector<8x512xf32>
    %cst_6 = arith.constant 1.000000e+00 : f32
    %9 = vector.broadcast %cst_6 : f32 to vector<8x512xf32>
    %10 = arith.addf %9, %8 : vector<8x512xf32>
    %11 = tpu.reciprocal %10 {approx = true} : vector<8x512xf32> -> vector<8x512xf32>
    %cst_7 = arith.constant 1.06140542 : f32
    %12 = vector.broadcast %cst_7 : f32 to vector<8x512xf32>
    %13 = arith.mulf %12, %11 : vector<8x512xf32>
    %cst_8 = arith.constant -1.45315206 : f32
    %14 = vector.broadcast %cst_8 : f32 to vector<8x512xf32>
    %15 = arith.addf %13, %14 : vector<8x512xf32>
    %16 = arith.mulf %15, %11 : vector<8x512xf32>
    %cst_9 = arith.constant 1.42141378 : f32
    %17 = vector.broadcast %cst_9 : f32 to vector<8x512xf32>
    %18 = arith.addf %16, %17 : vector<8x512xf32>
    %19 = arith.mulf %18, %11 : vector<8x512xf32>
    %cst_10 = arith.constant -0.284496725 : f32
    %20 = vector.broadcast %cst_10 : f32 to vector<8x512xf32>
    %21 = arith.addf %19, %20 : vector<8x512xf32>
    %22 = arith.mulf %21, %11 : vector<8x512xf32>
    %cst_11 = arith.constant 0.254829586 : f32
    %23 = vector.broadcast %cst_11 : f32 to vector<8x512xf32>
    %24 = arith.addf %22, %23 : vector<8x512xf32>
    %25 = arith.mulf %24, %11 : vector<8x512xf32>
    %cst_12 = arith.constant -5.000000e-01 : f32
    %26 = vector.broadcast %cst_12 : f32 to vector<8x512xf32>
    %27 = arith.mulf %26, %5 : vector<8x512xf32>
    %28 = arith.mulf %27, %5 : vector<8x512xf32>
    %29 = math.exp %28 : vector<8x512xf32>
    %30 = arith.mulf %25, %29 : vector<8x512xf32>
    %cst_13 = arith.constant 1.000000e+00 : f32
    %31 = vector.broadcast %cst_13 : f32 to vector<8x512xf32>
    %32 = arith.subf %31, %30 : vector<8x512xf32>
    %33 = arith.mulf %6, %32 : vector<8x512xf32>
    %34 = arith.addf %5, %33 : vector<8x512xf32>
    %cst_14 = arith.constant 5.000000e-01 : f32
    %35 = vector.broadcast %cst_14 : f32 to vector<8x512xf32>
    %36 = arith.mulf %35, %34 : vector<8x512xf32>
    %37 = arith.truncf %36 : vector<8x512xf32> to vector<8x512xbf16>
    %c0_15 = arith.constant 0 : index
    %c0_16 = arith.constant 0 : index
    %38 = vector.load %arg4[%c0_15, %c0_16] : memref<512x128xbf16, #tpu.memory_space<vmem>>, vector<512x128xbf16>
    %cst_17 = arith.constant dense<0.000000e+00> : vector<8x128xf32>
    %39 = tpu.matmul %37, %38, %cst_17 {dimension_numbers = #tpu.dot_dimension_numbers<[1], [0], [0], [1], [0, 0, 1, 1], [], []>} : vector<8x512xbf16>, vector<512x128xbf16>, vector<8x128xf32> -> vector<8x128xf32>
    %c0_18 = arith.constant 0 : index
    %c0_19 = arith.constant 0 : index
    %40 = vector.load %arg5[%c0_18, %c0_19] : memref<1x128xf32, #tpu.memory_space<vmem>>, vector<1x128xf32>
    %41 = vector.broadcast %40 : vector<1x128xf32> to vector<8x128xf32>
    %42 = arith.addf %39, %41 : vector<8x128xf32>
    %c0_20 = arith.constant 0 : index
    %c0_21 = arith.constant 0 : index
    %43 = vector.load %arg6[%c0_20, %c0_21] : memref<8x128xf32, #tpu.memory_space<vmem>>, vector<8x128xf32>
    tpu.vector_store %arg6[%c0_20, %c0_21], %42 {strides = array<i32>} : memref<8x128xf32, #tpu.memory_space<vmem>>, vector<8x128xf32>,
    return
  }
  func.func @transform_0(%arg0: i32) -> (i32, i32) {
    %c0_i32 = arith.constant 0 : i32
    %c0_i32_0 = arith.constant 0 : i32
    return %arg0, %c0_i32 : i32, i32
  }
  func.func @transform_1(%arg0: i32) -> (i32, i32) {
    %c0_i32 = arith.constant 0 : i32
    %c0_i32_0 = arith.constant 0 : i32
    %c0_i32_1 = arith.constant 0 : i32
    return %c0_i32, %c0_i32_0 : i32, i32
  }
  func.func @transform_2(%arg0: i32) -> (i32, i32) {
    %c0_i32 = arith.constant 0 : i32
    %c0_i32_0 = arith.constant 0 : i32
    %c0_i32_1 = arith.constant 0 : i32
    return %c0_i32, %c0_i32_0 : i32, i32
  }
  func.func @transform_3(%arg0: i32) -> (i32, i32) {
    %c0_i32 = arith.constant 0 : i32
    %c0_i32_0 = arith.constant 0 : i32
    %c0_i32_1 = arith.constant 0 : i32
    return %c0_i32, %c0_i32_0 : i32, i32
  }
  func.func @transform_4(%arg0: i32) -> (i32, i32) {
    %c0_i32 = arith.constant 0 : i32
    %c0_i32_0 = arith.constant 0 : i32
    %c0_i32_1 = arith.constant 0 : i32
    return %c0_i32, %c0_i32_0 : i32, i32
  }
  func.func @transform_5(%arg0: i32) -> (i32, i32) {
    %c0_i32 = arith.constant 0 : i32
    %c0_i32_0 = arith.constant 0 : i32
    return %arg0, %c0_i32 : i32, i32
  }
}

module attributes {stable_mosaic.version = 11 : i64} {
  func.func @ffn_kernel(%arg0: i32, %arg1: memref<8x128xbf16, #tpu.memory_space<vmem>>, %arg2: memref<128x512xbf16, #tpu.memory_space<vmem>>, %arg3: memref<1x512xf32, #tpu.memory_space<vmem>>, %arg4: memref<512x128xbf16, #tpu.memory_space<vmem>>, %arg5: memref<1x128xf32, #tpu.memory_space<vmem>>, %arg6: memref<8x128xf32, #tpu.memory_space<vmem>>) attributes {dimension_semantics = [#tpu.dimension_semantics<parallel>], iteration_bounds = array<i64: 2>, scalar_prefetch = 0 : i64, scratch_operands = 0 : i64, tpu.core_type = #tpu.core_type<tc>, window_params = [{transform_indices = @transform_0, window_bounds = array<i64: 8, 128>}, {pipeline_mode = #tpu.pipeline_mode<synchronous>, transform_indices = @transform_1, window_bounds = array<i64: 128, 512>}, {pipeline_mode = #tpu.pipeline_mode<synchronous>, transform_indices = @transform_2, window_bounds = array<i64: 1, 512>}, {pipeline_mode = #tpu.pipeline_mode<synchronous>, transform_indices = @transform_3, window_bounds = array<i64: 512, 128>}, {pipeline_mode = #tpu.pipeline_mode<synchronous>, transform_indices = @transform_4, window_bounds = array<i64: 1, 128>}, {transform_indices = @transform_5, window_bounds = array<i64: 8, 128>}]} {
    %c0 = arith.constant 0 : index
    %c0_0 = arith.constant 0 : index
    %0 = vector.load %arg1[%c0, %c0_0] : memref<8x128xbf16, #tpu.memory_space<vmem>>, vector<8x128xbf16>
    %c0_1 = arith.constant 0 : index
    %c0_2 = arith.constant 0 : index
    %1 = vector.load %arg2[%c0_1, %c0_2] : memref<128x512xbf16, #tpu.memory_space<vmem>>, vector<128x512xbf16>
    %cst = arith.constant dense<0.000000e+00> : vector<8x512xf32>
    %2 = tpu.matmul %0, %1, %cst {dimension_numbers = #tpu.dot_dimension_numbers<[1], [0], [0], [1], [0, 0, 1, 1], [], []>} : vector<8x128xbf16>, vector<128x512xbf16>, vector<8x512xf32> -> vector<8x512xf32>
    %c0_3 = arith.constant 0 : index
    %c0_4 = arith.constant 0 : index
    %3 = vector.load %arg3[%c0_3, %c0_4] : memref<1x512xf32, #tpu.memory_space<vmem>>, vector<1x512xf32>
    %4 = vector.broadcast %3 : vector<1x512xf32> to vector<8x512xf32>
    %5 = arith.addf %2, %4 : vector<8x512xf32>
    %6 = math.absf %5 : vector<8x512xf32>
    %cst_5 = arith.constant 0.231641889 : f32
    %7 = vector.broadcast %cst_5 : f32 to vector<8x512xf32>
    %8 = arith.mulf %7, %6 : vector<8x512xf32>
    %cst_6 = arith.constant 1.000000e+00 : f32
    %9 = vector.broadcast %cst_6 : f32 to vector<8x512xf32>
    %10 = arith.addf %9, %8 : vector<8x512xf32>
    %11 = tpu.reciprocal %10 {approx = true} : vector<8x512xf32> -> vector<8x512xf32>
    %cst_7 = arith.constant 1.06140542 : f32
    %12 = vector.broadcast %cst_7 : f32 to vector<8x512xf32>
    %13 = arith.mulf %12, %11 : vector<8x512xf32>
    %cst_8 = arith.constant -1.45315206 : f32
    %14 = vector.broadcast %cst_8 : f32 to vector<8x512xf32>
    %15 = arith.addf %13, %14 : vector<8x512xf32>
    %16 = arith.mulf %15, %11 : vector<8x512xf32>
    %cst_9 = arith.constant 1.42141378 : f32
    %17 = vector.broadcast %cst_9 : f32 to vector<8x512xf32>
    %18 = arith.addf %16, %17 : vector<8x512xf32>
    %19 = arith.mulf %18, %11 : vector<8x512xf32>
    %cst_10 = arith.constant -0.284496725 : f32
    %20 = vector.broadcast %cst_10 : f32 to vector<8x512xf32>
    %21 = arith.addf %19, %20 : vector<8x512xf32>
    %22 = arith.mulf %21, %11 : vector<8x512xf32>
    %cst_11 = arith.constant 0.254829586 : f32
    %23 = vector.broadcast %cst_11 : f32 to vector<8x512xf32>
    %24 = arith.addf %22, %23 : vector<8x512xf32>
    %25 = arith.mulf %24, %11 : vector<8x512xf32>
    %cst_12 = arith.constant -5.000000e-01 : f32
    %26 = vector.broadcast %cst_12 : f32 to vector<8x512xf32>
    %27 = arith.mulf %26, %5 : vector<8x512xf32>
    %28 = arith.mulf %27, %5 : vector<8x512xf32>
    %29 = math.exp %28 : vector<8x512xf32>
    %30 = arith.mulf %25, %29 : vector<8x512xf32>
    %cst_13 = arith.constant 1.000000e+00 : f32
    %31 = vector.broadcast %cst_13 : f32 to vector<8x512xf32>
    %32 = arith.subf %31, %30 : vector<8x512xf32>
    %33 = arith.mulf %6, %32 : vector<8x512xf32>
    %34 = arith.addf %5, %33 : vector<8x512xf32>
    %cst_14 = arith.constant 5.000000e-01 : f32
    %35 = vector.broadcast %cst_14 : f32 to vector<8x512xf32>
    %36 = arith.mulf %35, %34 : vector<8x512xf32>
    %37 = arith.truncf %36 : vector<8x512xf32> to vector<8x512xbf16>
    %c0_15 = arith.constant 0 : index
    %c0_16 = arith.constant 0 : index
    %38 = vector.load %arg4[%c0_15, %c0_16] : memref<512x128xbf16, #tpu.memory_space<vmem>>, vector<512x128xbf16>
    %cst_17 = arith.constant dense<0.000000e+00> : vector<8x128xf32>
    %39 = tpu.matmul %37, %38, %cst_17 {dimension_numbers = #tpu.dot_dimension_numbers<[1], [0], [0], [1], [0, 0, 1, 1], [], []>} : vector<8x512xbf16>, vector<512x128xbf16>, vector<8x128xf32> -> vector<8x128xf32>
    %c0_18 = arith.constant 0 : index
    %c0_19 = arith.constant 0 : index
    %40 = vector.load %arg5[%c0_18, %c0_19] : memref<1x128xf32, #tpu.memory_space<vmem>>, vector<1x128xf32>
    %41 = vector.broadcast %40 : vector<1x128xf32> to vector<8x128xf32>
    %42 = arith.addf %39, %41 : vector<8x128xf32>
    %c0_20 = arith.constant 0 : index
    %c0_21 = arith.constant 0 : index
    %43 = vector.load %arg6[%c0_20, %c0_21] : memref<8x128xf32, #tpu.memory_space<vmem>>, vector<8x128xf32>
    tpu.vector_store %arg6[%c0_20, %c0_21], %42 {strides = array<i32>} : memref<8x128xf32, #tpu.memory_space<vmem>>, vector<8x128xf32>,
    return
  }
  func.func @transform_0(%arg0: i32) -> (i32, i32) {
    %c0_i32 = arith.constant 0 : i32
    %c0_i32_0 = arith.constant 0 : i32
    return %arg0, %c0_i32 : i32, i32
  }
  func.func @transform_1(%arg0: i32) -> (i32, i32) {
    %c0_i32 = arith.constant 0 : i32
    %c0_i32_0 = arith.constant 0 : i32
    %c0_i32_1 = arith.constant 0 : i32
    return %c0_i32, %c0_i32_0 : i32, i32
  }
  func.func @transform_2(%arg0: i32) -> (i32, i32) {
    %c0_i32 = arith.constant 0 : i32
    %c0_i32_0 = arith.constant 0 : i32
    %c0_i32_1 = arith.constant 0 : i32
    return %c0_i32, %c0_i32_0 : i32, i32
  }
  func.func @transform_3(%arg0: i32) -> (i32, i32) {
    %c0_i32 = arith.constant 0 : i32
    %c0_i32_0 = arith.constant 0 : i32
    %c0_i32_1 = arith.constant 0 : i32
    return %c0_i32, %c0_i32_0 : i32, i32
  }
  func.func @transform_4(%arg0: i32) -> (i32, i32) {
    %c0_i32 = arith.constant 0 : i32
    %c0_i32_0 = arith.constant 0 : i32
    %c0_i32_1 = arith.constant 0 : i32
    return %c0_i32, %c0_i32_0 : i32, i32
  }
  func.func @transform_5(%arg0: i32) -> (i32, i32) {
    %c0_i32 = arith.constant 0 : i32
    %c0_i32_0 = arith.constant 0 : i32
    return %arg0, %c0_i32 : i32, i32
  }
}

</mosaic_0001>

<llo_original>
// kernel: tpu_custom_call.1
$region0: #{tpu_custom_call.1}
  #allocation0 [shape = 'u32[]', space=smem, size = 0x4, offset = 0x4, fixed_abs, tag = 'smem constant byte address 0x4 - core index']
  #allocation1 [shape = 'u32[144,128]{1,0:T(1,128)}', space=vmem, size = 0x12000, scoped, tag = 'internal scratch']
  %s0 = inlined_call_operand.hbm [shape: bf16[16,128], index: 0, kind: input, shape index: {}]
  %s1 = inlined_call_operand.hbm [shape: bf16[128,512], index: 1, kind: input, shape index: {}]
  %s2 = inlined_call_operand.vmem [shape: f32[1,512], index: 2, kind: input, shape index: {}]
  %s3 = inlined_call_operand.hbm [shape: bf16[512,128], index: 3, kind: input, shape index: {}]
  %s4 = inlined_call_operand.vmem [shape: f32[1,128], index: 4, kind: input, shape index: {}]
  %s5 = inlined_call_operand.hbm [shape: f32[16,128], index: 5, kind: output, shape index: {}]
  %s6 = sld [smem:[#allocation0]]
  $region65: #{tpu_custom_call.1} parent=0
    _
  %s8 = ssub.s32 1, %s6
  %s9 = scalar_select 0, %s8, %s6
  $region1: #{tpu_custom_call.1} parent=0
    #allocation2 [shape = 'u8[4096]{0}', space=vmem, size = 0x1000, scoped, tag = 'input window, operand 0']
    #allocation3 [shape = 's32[2]{0}', space=sflag, size = 0x8, scoped, tag = 'scoped memory for tpu_custom_call.1']
    #allocation4 [shape = 's32[2]{0}', space=sflag, size = 0x8, scoped, tag = 'scoped memory for tpu_custom_call.1']
    #allocation5 [shape = 'u8[131072]{0}', space=vmem, size = 0x20000, scoped, tag = 'input window, operand 1, single buffered']
    #allocation6 [shape = 's32[1]{0}', space=sflag, size = 0x4, scoped, tag = 'scoped memory for tpu_custom_call.1']
    #allocation7 [shape = 'u8[131072]{0}', space=vmem, size = 0x20000, scoped, tag = 'input window, operand 3, single buffered']
    #allocation8 [shape = 'u8[8192]{0}', space=vmem, size = 0x2000, scoped, tag = 'output window, operand 0']
    %10 = vsyncpa [#allocation3], 0
    %s11 = scalar_lea.sflag [#allocation3], 1
    %12 = vsyncpa %s11, 0
    %13 = vsyncpa [#allocation6], 0
    %14 = vsyncpa [#allocation4], 0
    %s15 = scalar_lea.sflag [#allocation4], 1
    %16 = vsyncpa %s15, 0
    loop: start=0, step=1, limit=4
    $region2: #{tpu_custom_call.1} parent=1 // loop_pre_header
      _
    $region3: #{tpu_custom_call.1} parent=1 // loop_header
      %s18 = sphi 0, %s22
      %p19 = scmp.ge.s32.totalorder %s18, 4
      %s28 = sphi 0, %s30
      %s31 = sphi 0, %s28
      %s32 = sphi 0, %s31
      %s48 = sphi 0, %s32
      %s52 = sphi 0, %s52
      %s54 = sphi 0, %s52
      %s55 = sphi 0, %s54
      %s69 = sphi 0, %s55
      %s73 = sphi 0, %s73
      %s75 = sphi 0, %s73
      %s76 = sphi 0, %s75
      %s90 = sphi 0, %s76
      %s94 = sphi 0, %s94
      %s96 = sphi 0, %s94
      %s97 = sphi 0, %s96
      %s111 = sphi 0, %s97
      %s115 = sphi 0, %s115
      %s117 = sphi 0, %s115
      %s118 = sphi 0, %s117
      %s132 = sphi 0, %s118
      %s138 = sphi 0, %s140
      %s141 = sphi 0, %s138
      %s142 = sphi 0, %s141
      %s158 = sphi 0, %s142
    $region4: #{tpu_custom_call.1} parent=1 // loop_header_branch
      %21 = sbr.rel (%p19) target = $region8
    $region5: #{tpu_custom_call.1} parent=1 // loop_body
      %s23 = ssub.s32 %s18, 1
      %s24 = ssub.s32 %s18, 2
      %s25 = sadd.s32 %s18, 1
      %s26 = ssub.s32 %s18, %s25
      %p27 = scmp.eq.s32.totalorder %s26, 0
      %s29 = sadd.s32 %s28, 1
      %s30 = scalar_select %p27, %s28, %s29
      %p33 = pneg %p27
      %p34 = scmp.eq.s32.totalorder %s18, 1
      %p35 = por %p33, %p34
      %p36 = scmp.ne.s32.totalorder %s28, %s31
      %p37 = scmp.eq.s32.totalorder %s18, 0
      %p38 = por %p36, %p37
      %p39 = scmp.ne.s32.totalorder %s28, %s31
      %p40 = scmp.eq.s32.totalorder %s23, 1
      %p41 = por %p39, %p40
      %p42 = scmp.ne.s32.totalorder %s31, %s32
      %p43 = scmp.eq.s32.totalorder %s23, 0
      %p44 = por %p42, %p43
      %p45 = scmp.ne.s32.totalorder %s31, %s32
      %p46 = scmp.eq.s32.totalorder %s24, 1
      %p47 = por %p45, %p46
      %p49 = scmp.ne.s32.totalorder %s32, %s48
      %p50 = scmp.eq.s32.totalorder %s24, 0
      %p51 = por %p49, %p50
      %s53 = sadd.s32 %s52, 1
      %p56 = scmp.eq.s32.totalorder %s18, 1
      %p57 = scmp.ne.s32.totalorder %s52, %s54
      %p58 = scmp.eq.s32.totalorder %s18, 0
      %p59 = por %p57, %p58
      %p60 = scmp.ne.s32.totalorder %s52, %s54
      %p61 = scmp.eq.s32.totalorder %s23, 1
      %p62 = por %p60, %p61
      %p63 = scmp.ne.s32.totalorder %s54, %s55
      %p64 = scmp.eq.s32.totalorder %s23, 0
      %p65 = por %p63, %p64
      %p66 = scmp.ne.s32.totalorder %s54, %s55
      %p67 = scmp.eq.s32.totalorder %s24, 1
      %p68 = por %p66, %p67
      %p70 = scmp.ne.s32.totalorder %s55, %s69
      %p71 = scmp.eq.s32.totalorder %s24, 0
      %p72 = por %p70, %p71
      %s74 = sadd.s32 %s73, 1
      %p77 = scmp.eq.s32.totalorder %s18, 1
      %p78 = scmp.ne.s32.totalorder %s73, %s75
      %p79 = scmp.eq.s32.totalorder %s18, 0
      %p80 = por %p78, %p79
      %p81 = scmp.ne.s32.totalorder %s73, %s75
      %p82 = scmp.eq.s32.totalorder %s23, 1
      %p83 = por %p81, %p82
      %p84 = scmp.ne.s32.totalorder %s75, %s76
      %p85 = scmp.eq.s32.totalorder %s23, 0
      %p86 = por %p84, %p85
      %p87 = scmp.ne.s32.totalorder %s75, %s76
      %p88 = scmp.eq.s32.totalorder %s24, 1
      %p89 = por %p87, %p88
      %p91 = scmp.ne.s32.totalorder %s76, %s90
      %p92 = scmp.eq.s32.totalorder %s24, 0
      %p93 = por %p91, %p92
      %s95 = sadd.s32 %s94, 1
      %p98 = scmp.eq.s32.totalorder %s18, 1
      %p99 = scmp.ne.s32.totalorder %s94, %s96
      %p100 = scmp.eq.s32.totalorder %s18, 0
      %p101 = por %p99, %p100
      %p102 = scmp.ne.s32.totalorder %s94, %s96
      %p103 = scmp.eq.s32.totalorder %s23, 1
      %p104 = por %p102, %p103
      %p105 = scmp.ne.s32.totalorder %s96, %s97
      %p106 = scmp.eq.s32.totalorder %s23, 0
      %p107 = por %p105, %p106
      %p108 = scmp.ne.s32.totalorder %s96, %s97
      %p109 = scmp.eq.s32.totalorder %s24, 1
      %p110 = por %p108, %p109
      %p112 = scmp.ne.s32.totalorder %s97, %s111
      %p113 = scmp.eq.s32.totalorder %s24, 0
      %p114 = por %p112, %p113
      %s116 = sadd.s32 %s115, 1
      %p119 = scmp.eq.s32.totalorder %s18, 1
      %p120 = scmp.ne.s32.totalorder %s115, %s117
      %p121 = scmp.eq.s32.totalorder %s18, 0
      %p122 = por %p120, %p121
      %p123 = scmp.ne.s32.totalorder %s115, %s117
      %p124 = scmp.eq.s32.totalorder %s23, 1
      %p125 = por %p123, %p124
      %p126 = scmp.ne.s32.totalorder %s117, %s118
      %p127 = scmp.eq.s32.totalorder %s23, 0
      %p128 = por %p126, %p127
      %p129 = scmp.ne.s32.totalorder %s117, %s118
      %p130 = scmp.eq.s32.totalorder %s24, 1
      %p131 = por %p129, %p130
      %p133 = scmp.ne.s32.totalorder %s118, %s132
      %p134 = scmp.eq.s32.totalorder %s24, 0
      %p135 = por %p133, %p134
      %s136 = ssub.s32 %s18, %s25
      %p137 = scmp.eq.s32.totalorder %s136, 0
      %s139 = sadd.s32 %s138, 1
      %s140 = scalar_select %p137, %s138, %s139
      %p143 = pneg %p137
      %p144 = scmp.eq.s32.totalorder %s18, 1
      %p145 = por %p143, %p144
      %p146 = scmp.ne.s32.totalorder %s138, %s141
      %p147 = scmp.eq.s32.totalorder %s18, 0
      %p148 = por %p146, %p147
      %p149 = scmp.ne.s32.totalorder %s138, %s141
      %p150 = scmp.eq.s32.totalorder %s23, 1
      %p151 = por %p149, %p150
      %p152 = scmp.ne.s32.totalorder %s141, %s142
      %p153 = scmp.eq.s32.totalorder %s23, 0
      %p154 = por %p152, %p153
      %p155 = scmp.ne.s32.totalorder %s141, %s142
      %p156 = scmp.eq.s32.totalorder %s24, 1
      %p157 = por %p155, %p156
      %p159 = scmp.ne.s32.totalorder %s142, %s158
      %p160 = scmp.eq.s32.totalorder %s24, 0
      %p161 = por %p159, %p160
      %p162 = scmp.le.s32.totalorder 1, %s18
      %p163 = scmp.lt.s32.totalorder %s18, 3
      %p164 = pnand %p162, %p163
      %p165 = pneg %p164
      // Predicated region
      $region9: #{tpu_custom_call.1} parent=5 // pred_check
        _
      $region10: #{tpu_custom_call.1} parent=5 // pred_check_branch
        %167 = sbr.rel (%p164) target = $region12
      $region11: #{tpu_custom_call.1} parent=5 // pred_region
        %s168 = ssub.s32 %s18, 1
        // Predicated region
        $region13: #{tpu_custom_call.1} parent=11 // pred_check
          %p169 = pneg %p65
        $region14: #{tpu_custom_call.1} parent=11 // pred_check_branch
          %171 = sbr.rel (%p169) target = $region16
        $region15: #{tpu_custom_call.1} parent=11 // pred_region
          %s173 = ssub.s32 4096, 4096
          %174 = vsyncadd [#allocation6], %s173
          %s175 = sshll.u32 [#allocation5], 4
          %s176 = int_to_ptr.vmem [resolvable:$true] %s175
          %181 = dma.hbm_to_vmem [thread:$0]  %s1, 4096, %s176, [#allocation6], 256, 256, 16
        $region16: #{tpu_custom_call.1} parent=11 // pred_fallthru
          _
        // Predicated region
        $region17: #{tpu_custom_call.1} parent=11 // pred_check
          %p182 = pneg %p86
        $region18: #{tpu_custom_call.1} parent=11 // pred_check_branch
          %184 = sbr.rel (%p182) target = $region20
        $region19: #{tpu_custom_call.1} parent=11 // pred_region
          _
        $region20: #{tpu_custom_call.1} parent=11 // pred_fallthru
          _
        // Predicated region
        $region21: #{tpu_custom_call.1} parent=11 // pred_check
          %p185 = pneg %p107
        $region22: #{tpu_custom_call.1} parent=11 // pred_check_branch
          %187 = sbr.rel (%p185) target = $region24
        $region23: #{tpu_custom_call.1} parent=11 // pred_region
          %s189 = ssub.s32 4096, 4096
          %190 = vsyncadd [#allocation6], %s189
          %s191 = sshll.u32 [#allocation7], 4
          %s192 = int_to_ptr.vmem [resolvable:$true] %s191
          %197 = dma.hbm_to_vmem [thread:$0]  %s3, 4096, %s192, [#allocation6], 64, 64, 4
        $region24: #{tpu_custom_call.1} parent=11 // pred_fallthru
          _
        // Predicated region
        $region25: #{tpu_custom_call.1} parent=11 // pred_check
          %p198 = pneg %p128
        $region26: #{tpu_custom_call.1} parent=11 // pred_check_branch
          %200 = sbr.rel (%p198) target = $region28
        $region27: #{tpu_custom_call.1} parent=11 // pred_region
          _
        $region28: #{tpu_custom_call.1} parent=11 // pred_fallthru
          _
      $region12: #{tpu_custom_call.1} parent=5 // pred_fallthru
        _
      %p201 = scmp.lt.s32.totalorder %s18, 2
      // Predicated region
      $region29: #{tpu_custom_call.1} parent=5 // pred_check
        %p202 = pneg %p201
      $region30: #{tpu_custom_call.1} parent=5 // pred_check_branch
        %204 = sbr.rel (%p202) target = $region32
      $region31: #{tpu_custom_call.1} parent=5 // pred_region
        // Predicated region
        $region33: #{tpu_custom_call.1} parent=31 // pred_check
          %p205 = pneg %p38
        $region34: #{tpu_custom_call.1} parent=31 // pred_check_branch
          %207 = sbr.rel (%p205) target = $region36
        $region35: #{tpu_custom_call.1} parent=31 // pred_region
          %s208 = sand.u32 %s28, 1
          %s209 = scalar_lea.sflag [#allocation3], %s208
          %s210 = sand.u32 %s28, 1
          %s211 = smul.addr %s210, 4
          %s212 = scalar_lea.vmem [#allocation2], %s211
          %s214 = ssub.s32 64, 64
          %215 = vsyncadd %s209, %s214
          %s216 = smul.addr %s18, 64
          %s217 = scalar_lea.hbm %s0, %s216
          %s219 = sshll.u32 %s212, 4
          %s220 = int_to_ptr.vmem [resolvable:$true] %s219
          %222 = dma.hbm_to_vmem [thread:$0]  %s217, 64, %s220, %s209
        $region36: #{tpu_custom_call.1} parent=31 // pred_fallthru
          _
      $region32: #{tpu_custom_call.1} parent=5 // pred_fallthru
        _
      %p223 = scmp.le.s32.totalorder 1, %s18
      %p224 = scmp.lt.s32.totalorder %s18, 3
      %p225 = pnand %p223, %p224
      %p226 = pneg %p225
      // Predicated region
      $region37: #{tpu_custom_call.1} parent=5 // pred_check
        _
      $region38: #{tpu_custom_call.1} parent=5 // pred_check_branch
        %228 = sbr.rel (%p225) target = $region40
      $region39: #{tpu_custom_call.1} parent=5 // pred_region
        %s229 = ssub.s32 %s18, 1
        %s230 = sand.u32 %s31, 1
        %s231 = scalar_lea.sflag [#allocation3], %s230
        %s232 = sand.u32 %s31, 1
        %s233 = smul.addr %s232, 4
        %s234 = scalar_lea.vmem [#allocation2], %s233
        // Predicated region
        $region41: #{tpu_custom_call.1} parent=39 // pred_check
          %p235 = pneg %p44
        $region42: #{tpu_custom_call.1} parent=39 // pred_check_branch
          %237 = sbr.rel (%p235) target = $region44
        $region43: #{tpu_custom_call.1} parent=39 // pred_region
          %238 = dma.done %s231, 64
        $region44: #{tpu_custom_call.1} parent=39 // pred_fallthru
          _
        // Predicated region
        $region45: #{tpu_custom_call.1} parent=39 // pred_check
          %p239 = pneg %p65
        $region46: #{tpu_custom_call.1} parent=39 // pred_check_branch
          %241 = sbr.rel (%p239) target = $region48
        $region47: #{tpu_custom_call.1} parent=39 // pred_region
          %242 = dma.done [#allocation6], 4096
        $region48: #{tpu_custom_call.1} parent=39 // pred_fallthru
          _
        // Predicated region
        $region49: #{tpu_custom_call.1} parent=39 // pred_check
          %p243 = pneg %p107
        $region50: #{tpu_custom_call.1} parent=39 // pred_check_branch
          %245 = sbr.rel (%p243) target = $region52
        $region51: #{tpu_custom_call.1} parent=39 // pred_region
          %246 = dma.done [#allocation6], 4096
        $region52: #{tpu_custom_call.1} parent=39 // pred_fallthru
          _
        %s247 = sand.u32 %s31, 1
        %s248 = scalar_lea.sflag [#allocation3], %s247
        %s249 = sand.u32 %s31, 1
        %s250 = smul.addr %s249, 4
        %s251 = scalar_lea.vmem [#allocation2], %s250
        %p252 = pneg %p44
        %p253 = pneg %p41
        %p254 = pneg %p65
        %p255 = pneg %p62
        %p256 = pneg %p86
        %p257 = pneg %p83
        %p258 = pneg %p107
        %p259 = pneg %p104
        %p260 = pneg %p128
        %p261 = pneg %p125
        %p262 = pneg %p154
        %p263 = pneg %p151
        %s264 = sand.u32 %s141, 1
        %s265 = scalar_lea.sflag [#allocation4], %s264
        %s266 = sand.u32 %s141, 1
        %s267 = smul.addr %s266, 8
        %s268 = scalar_lea.vmem [#allocation8], %s267
        %v270 = vld [vmem:[%s234] sm:$0xf]
        %v271 = vld [vmem:[#allocation5] sm:$0xff]
        %v272 = vld [vmem:[#allocation5 + $0x8] sm:$0xff]
        %v273 = vld [vmem:[#allocation5 + $0x10] sm:$0xff]
        %v274 = vld [vmem:[#allocation5 + $0x18] sm:$0xff]
        %v275 = vld [vmem:[#allocation5 + $0x20] sm:$0xff]
        %v276 = vld [vmem:[#allocation5 + $0x28] sm:$0xff]
        %v277 = vld [vmem:[#allocation5 + $0x30] sm:$0xff]
        %v278 = vld [vmem:[#allocation5 + $0x38] sm:$0xff]
        %v279 = vld [vmem:[#allocation5 + $0x40] sm:$0xff]
        %v280 = vld [vmem:[#allocation5 + $0x48] sm:$0xff]
        %v281 = vld [vmem:[#allocation5 + $0x50] sm:$0xff]
        %v282 = vld [vmem:[#allocation5 + $0x58] sm:$0xff]
        %v283 = vld [vmem:[#allocation5 + $0x60] sm:$0xff]
        %v284 = vld [vmem:[#allocation5 + $0x68] sm:$0xff]
        %v285 = vld [vmem:[#allocation5 + $0x70] sm:$0xff]
        %v286 = vld [vmem:[#allocation5 + $0x78] sm:$0xff]
        %v287 = vld [vmem:[#allocation5 + $0x80] sm:$0xff]
        %v288 = vld [vmem:[#allocation5 + $0x88] sm:$0xff]
        %v289 = vld [vmem:[#allocation5 + $0x90] sm:$0xff]
        %v290 = vld [vmem:[#allocation5 + $0x98] sm:$0xff]
        %v291 = vld [vmem:[#allocation5 + $0xa0] sm:$0xff]
        %v292 = vld [vmem:[#allocation5 + $0xa8] sm:$0xff]
        %v293 = vld [vmem:[#allocation5 + $0xb0] sm:$0xff]
        %v294 = vld [vmem:[#allocation5 + $0xb8] sm:$0xff]
        %v295 = vld [vmem:[#allocation5 + $0xc0] sm:$0xff]
        %v296 = vld [vmem:[#allocation5 + $0xc8] sm:$0xff]
        %v297 = vld [vmem:[#allocation5 + $0xd0] sm:$0xff]
        %v298 = vld [vmem:[#allocation5 + $0xd8] sm:$0xff]
        %v299 = vld [vmem:[#allocation5 + $0xe0] sm:$0xff]
        %v300 = vld [vmem:[#allocation5 + $0xe8] sm:$0xff]
        %v301 = vld [vmem:[#allocation5 + $0xf0] sm:$0xff]
        %v302 = vld [vmem:[#allocation5 + $0xf8] sm:$0xff]
        %v303 = vld [vmem:[%s2] sm:$0xf]
        %v305 = vlaneseq
        %v306 = vshrl.u32 %v305, 7
        %v307 = vsub.s32 0, %v306
        %v308 = vrot.slane %v303, %v307
        %v309 = vlaneseq
        %v310 = vshrl.u32 %v309, 7
        %v311 = vsub.s32 1, %v310
        %v312 = vrot.slane %v303, %v311
        %v313 = vlaneseq
        %v314 = vshrl.u32 %v313, 7
        %v315 = vsub.s32 2, %v314
        %v316 = vrot.slane %v303, %v315
        %v317 = vlaneseq
        %v318 = vshrl.u32 %v317, 7
        %v319 = vsub.s32 3, %v318
        %v320 = vrot.slane %v303, %v319
        %v357 = vunpack.c.l.b16 %v271
        %v358 = vunpack.c.h.b16 %v271
        %v359 = vunpack.c.l.b16 %v272
        %v360 = vunpack.c.h.b16 %v272
        %v361 = vunpack.c.l.b16 %v273
        %v362 = vunpack.c.h.b16 %v273
        %v363 = vunpack.c.l.b16 %v274
        %v364 = vunpack.c.h.b16 %v274
        %v365 = vunpack.c.l.b16 %v275
        %v366 = vunpack.c.h.b16 %v275
        %v367 = vunpack.c.l.b16 %v276
        %v368 = vunpack.c.h.b16 %v276
        %v369 = vunpack.c.l.b16 %v277
        %v370 = vunpack.c.h.b16 %v277
        %v371 = vunpack.c.l.b16 %v278
        %v372 = vunpack.c.h.b16 %v278
        %v373 = vunpack.c.l.b16 %v279
        %v374 = vunpack.c.h.b16 %v279
        %v375 = vunpack.c.l.b16 %v280
        %v376 = vunpack.c.h.b16 %v280
        %v377 = vunpack.c.l.b16 %v281
        %v378 = vunpack.c.h.b16 %v281
        %v379 = vunpack.c.l.b16 %v282
        %v380 = vunpack.c.h.b16 %v282
        %v381 = vunpack.c.l.b16 %v283
        %v382 = vunpack.c.h.b16 %v283
        %v383 = vunpack.c.l.b16 %v284
        %v384 = vunpack.c.h.b16 %v284
        %v385 = vunpack.c.l.b16 %v285
        %v386 = vunpack.c.h.b16 %v285
        %v387 = vunpack.c.l.b16 %v286
        %v388 = vunpack.c.h.b16 %v286
        %v389 = vunpack.c.l.b16 %v287
        %v390 = vunpack.c.h.b16 %v287
        %v391 = vunpack.c.l.b16 %v288
        %v392 = vunpack.c.h.b16 %v288
        %v393 = vunpack.c.l.b16 %v289
        %v394 = vunpack.c.h.b16 %v289
        %v395 = vunpack.c.l.b16 %v290
        %v396 = vunpack.c.h.b16 %v290
        %v397 = vunpack.c.l.b16 %v291
        %v398 = vunpack.c.h.b16 %v291
        %v399 = vunpack.c.l.b16 %v292
        %v400 = vunpack.c.h.b16 %v292
        %v401 = vunpack.c.l.b16 %v293
        %v402 = vunpack.c.h.b16 %v293
        %v403 = vunpack.c.l.b16 %v294
        %v404 = vunpack.c.h.b16 %v294
        %v405 = vunpack.c.l.b16 %v295
        %v406 = vunpack.c.h.b16 %v295
        %v407 = vunpack.c.l.b16 %v296
        %v408 = vunpack.c.h.b16 %v296
        %v409 = vunpack.c.l.b16 %v297
        %v410 = vunpack.c.h.b16 %v297
        %v411 = vunpack.c.l.b16 %v298
        %v412 = vunpack.c.h.b16 %v298
        %v413 = vunpack.c.l.b16 %v299
        %v414 = vunpack.c.h.b16 %v299
        %v415 = vunpack.c.l.b16 %v300
        %v416 = vunpack.c.h.b16 %v300
        %v417 = vunpack.c.l.b16 %v301
        %v418 = vunpack.c.h.b16 %v301
        %v419 = vunpack.c.l.b16 %v302
        %v420 = vunpack.c.h.b16 %v302
        %v421 = vpack.c.b16 %v361, %v357
        %v422 = vpack.c.b16 %v362, %v358
        %v423 = vpack.c.b16 %v363, %v359
        %v424 = vpack.c.b16 %v364, %v360
        %v425 = vpack.c.b16 %v369, %v365
        %v426 = vpack.c.b16 %v370, %v366
        %v427 = vpack.c.b16 %v371, %v367
        %v428 = vpack.c.b16 %v372, %v368
        %v429 = vpack.c.b16 %v377, %v373
        %v430 = vpack.c.b16 %v378, %v374
        %v431 = vpack.c.b16 %v379, %v375
        %v432 = vpack.c.b16 %v380, %v376
        %v433 = vpack.c.b16 %v385, %v381
        %v434 = vpack.c.b16 %v386, %v382
        %v435 = vpack.c.b16 %v387, %v383
        %v436 = vpack.c.b16 %v388, %v384
        %v437 = vpack.c.b16 %v393, %v389
        %v438 = vpack.c.b16 %v394, %v390
        %v439 = vpack.c.b16 %v395, %v391
        %v440 = vpack.c.b16 %v396, %v392
        %v441 = vpack.c.b16 %v401, %v397
        %v442 = vpack.c.b16 %v402, %v398
        %v443 = vpack.c.b16 %v403, %v399
        %v444 = vpack.c.b16 %v404, %v400
        %v445 = vpack.c.b16 %v409, %v405
        %v446 = vpack.c.b16 %v410, %v406
        %v447 = vpack.c.b16 %v411, %v407
        %v448 = vpack.c.b16 %v412, %v408
        %v449 = vpack.c.b16 %v417, %v413
        %v450 = vpack.c.b16 %v418, %v414
        %v451 = vpack.c.b16 %v419, %v415
        %v452 = vpack.c.b16 %v420, %v416
        %485 = vmatprep.subr.bf16.mxu0 %v422
        %486 = vmatpush1.bf16.msra.mxu0 %v421
        %487 = vmatprep.subr.bf16.mxu0 %v426
        %488 = vmatpush1.bf16.msra.mxu0 %v425
        %489 = vmatprep.subr.bf16.mxu0 %v430
        %490 = vmatpush1.bf16.msra.mxu0 %v429
        %491 = vmatprep.subr.bf16.mxu0 %v434
        %492 = vmatpush1.bf16.msra.mxu0 %v433
        %493 = vmatprep.subr.bf16.mxu0 %v438
        %494 = vmatpush1.bf16.msra.mxu0 %v437
        %495 = vmatprep.subr.bf16.mxu0 %v442
        %496 = vmatpush1.bf16.msra.mxu0 %v441
        %497 = vmatprep.subr.bf16.mxu0 %v446
        %498 = vmatpush1.bf16.msra.mxu0 %v445
        %499 = vmatprep.subr.bf16.mxu0 %v450
        %500 = vmatpush1.bf16.msra.mxu0 %v449
        %501 = vmatprep.subr.bf16.mxu0 0
        %502 = vmatpush1.bf16.msra.mxu0 0
        %503 = vmatprep.subr.bf16.mxu0 0
        %504 = vmatpush1.bf16.msra.mxu0 0
        %505 = vmatprep.subr.bf16.mxu0 0
        %506 = vmatpush1.bf16.msra.mxu0 0
        %507 = vmatprep.subr.bf16.mxu0 0
        %508 = vmatpush1.bf16.msra.mxu0 0
        %509 = vmatprep.subr.bf16.mxu0 0
        %510 = vmatpush1.bf16.msra.mxu0 0
        %511 = vmatprep.subr.bf16.mxu0 0
        %512 = vmatpush1.bf16.msra.mxu0 0
        %513 = vmatprep.subr.bf16.mxu0 0
        %514 = vmatpush1.bf16.msra.mxu0 0
        %515 = vmatprep.subr.bf16.mxu0 0
        %516 = vmatpush1.bf16.msra.mxu0 0
        %517 = vmatprep.mubr.bf16.mxu0 0
        %518 = vmatmul.mubr.bf16.gmra.mrb[0].mxu0 %v270
        %v519 = vpop.f32.mrb[0].mxu0
        %v520 = vadd.f32 %v308, %v519
        %v521 = vpop.f32.mrb[0].mxu0
        %v522 = vadd.f32 %v312, %v521
        %v523 = vpop.f32.mrb[0].mxu0
        %v524 = vpop.f32.mrb[0].mxu0
        %525 = vdwg.mxu0
        %526 = vmatprep.subr.bf16.mxu0 %v424
        %527 = vmatpush1.bf16.msra.mxu0 %v423
        %528 = vmatprep.subr.bf16.mxu0 %v428
        %529 = vmatpush1.bf16.msra.mxu0 %v427
        %530 = vmatprep.subr.bf16.mxu0 %v432
        %531 = vmatpush1.bf16.msra.mxu0 %v431
        %532 = vmatprep.subr.bf16.mxu0 %v436
        %533 = vmatpush1.bf16.msra.mxu0 %v435
        %534 = vmatprep.subr.bf16.mxu0 %v440
        %535 = vmatpush1.bf16.msra.mxu0 %v439
        %536 = vmatprep.subr.bf16.mxu0 %v444
        %537 = vmatpush1.bf16.msra.mxu0 %v443
        %538 = vmatprep.subr.bf16.mxu0 %v448
        %539 = vmatpush1.bf16.msra.mxu0 %v447
        %540 = vmatprep.subr.bf16.mxu0 %v452
        %541 = vmatpush1.bf16.msra.mxu0 %v451
        %542 = vmatprep.subr.bf16.mxu0 0
        %543 = vmatpush1.bf16.msra.mxu0 0
        %544 = vmatprep.subr.bf16.mxu0 0
        %545 = vmatpush1.bf16.msra.mxu0 0
        %546 = vmatprep.subr.bf16.mxu0 0
        %547 = vmatpush1.bf16.msra.mxu0 0
        %548 = vmatprep.subr.bf16.mxu0 0
        %549 = vmatpush1.bf16.msra.mxu0 0
        %550 = vmatprep.subr.bf16.mxu0 0
        %551 = vmatpush1.bf16.msra.mxu0 0
        %552 = vmatprep.subr.bf16.mxu0 0
        %553 = vmatpush1.bf16.msra.mxu0 0
        %554 = vmatprep.subr.bf16.mxu0 0
        %555 = vmatpush1.bf16.msra.mxu0 0
        %556 = vmatprep.subr.bf16.mxu0 0
        %557 = vmatpush1.bf16.msra.mxu0 0
        %558 = vmatprep.mubr.bf16.mxu0 0
        %559 = vmatmul.mubr.bf16.gmra.mrb[0].mxu0 %v270
        %v560 = vpop.f32.mrb[0].mxu0
        %v561 = vadd.f32 %v316, %v560
        %v562 = vpop.f32.mrb[0].mxu0
        %v563 = vadd.f32 %v320, %v562
        %v564 = vpop.f32.mrb[0].mxu0
        %v565 = vpop.f32.mrb[0].mxu0
        %566 = vdwg.mxu0
        %v567 = vand.u32 2147483647, %v520
        %v568 = vand.u32 2147483647, %v522
        %v569 = vand.u32 2147483647, %v561
        %v570 = vand.u32 2147483647, %v563
        %v571 = vmul.f32 %v567, 0.23164189
        %v572 = vmul.f32 %v568, 0.23164189
        %v573 = vmul.f32 %v569, 0.23164189
        %v574 = vmul.f32 %v570, 0.23164189
        %v575 = vadd.f32 %v571, 1.0
        %v576 = vadd.f32 %v572, 1.0
        %v577 = vadd.f32 %v573, 1.0
        %v578 = vadd.f32 %v574, 1.0
        %v579 = vrcp.pop %v575
        %v580 = vrcp.pop %v576
        %v581 = vrcp.pop %v577
        %v582 = vrcp.pop %v578
        %v583 = vmul.f32 %v579, 1.0614054
        %v584 = vmul.f32 %v580, 1.0614054
        %v585 = vmul.f32 %v581, 1.0614054
        %v586 = vmul.f32 %v582, 1.0614054
        %v587 = vadd.f32 %v583, -1.4531521
        %v588 = vadd.f32 %v584, -1.4531521
        %v589 = vadd.f32 %v585, -1.4531521
        %v590 = vadd.f32 %v586, -1.4531521
        %v591 = vmul.f32 %v587, %v579
        %v592 = vmul.f32 %v588, %v580
        %v593 = vmul.f32 %v589, %v581
        %v594 = vmul.f32 %v590, %v582
        %v595 = vadd.f32 %v591, 1.4214138
        %v596 = vadd.f32 %v592, 1.4214138
        %v597 = vadd.f32 %v593, 1.4214138
        %v598 = vadd.f32 %v594, 1.4214138
        %v599 = vmul.f32 %v595, %v579
        %v600 = vmul.f32 %v596, %v580
        %v601 = vmul.f32 %v597, %v581
        %v602 = vmul.f32 %v598, %v582
        %v603 = vadd.f32 %v599, -0.28449672
        %v604 = vadd.f32 %v600, -0.28449672
        %v605 = vadd.f32 %v601, -0.28449672
        %v606 = vadd.f32 %v602, -0.28449672
        %v607 = vmul.f32 %v603, %v579
        %v608 = vmul.f32 %v604, %v580
        %v609 = vmul.f32 %v605, %v581
        %v610 = vmul.f32 %v606, %v582
        %v611 = vadd.f32 %v607, 0.2548296
        %v612 = vadd.f32 %v608, 0.2548296
        %v613 = vadd.f32 %v609, 0.2548296
        %v614 = vadd.f32 %v610, 0.2548296
        %v615 = vmul.f32 %v611, %v579
        %v616 = vmul.f32 %v612, %v580
        %v617 = vmul.f32 %v613, %v581
        %v618 = vmul.f32 %v614, %v582
        %v619 = vmul.f32 %v520, -0.5
        %v620 = vmul.f32 %v522, -0.5
        %v621 = vmul.f32 %v561, -0.5
        %v622 = vmul.f32 %v563, -0.5
        %v623 = vmul.f32 %v619, %v520
        %v624 = vmul.f32 %v620, %v522
        %v625 = vmul.f32 %v621, %v561
        %v626 = vmul.f32 %v622, %v563
        %v627 = vmul.f32 %v623, 1.442695
        %v628 = vpow.pop %v627
        %v629 = vmul.f32 %v624, 1.442695
        %v630 = vpow.pop %v629
        %v631 = vmul.f32 %v625, 1.442695
        %v632 = vpow.pop %v631
        %v633 = vmul.f32 %v626, 1.442695
        %v634 = vpow.pop %v633
        %v635 = vmul.f32 %v615, %v628
        %v636 = vmul.f32 %v616, %v630
        %v637 = vmul.f32 %v617, %v632
        %v638 = vmul.f32 %v618, %v634
        %v639 = vsub.f32 1.0, %v635
        %v640 = vsub.f32 1.0, %v636
        %v641 = vsub.f32 1.0, %v637
        %v642 = vsub.f32 1.0, %v638
        %v643 = vmul.f32 %v567, %v639
        %v644 = vmul.f32 %v568, %v640
        %v645 = vmul.f32 %v569, %v641
        %v646 = vmul.f32 %v570, %v642
        %v647 = vadd.f32 %v520, %v643
        %v648 = vadd.f32 %v522, %v644
        %v649 = vadd.f32 %v561, %v645
        %v650 = vadd.f32 %v563, %v646
        %v651 = vmul.f32 %v647, 0.5
        %v652 = vmul.f32 %v648, 0.5
        %v653 = vmul.f32 %v649, 0.5
        %v654 = vmul.f32 %v650, 0.5
        %v655 = vpack.c.bf16 %v651, %v651
        %v656 = vpack.c.bf16 %v652, %v652
        %v657 = vpack.c.bf16 %v653, %v653
        %v658 = vpack.c.bf16 %v654, %v654
        %v659 = vld [vmem:[#allocation7] sm:$0xf]
        %v660 = vld [vmem:[#allocation7 + $0x4] sm:$0xf]
        %v661 = vld [vmem:[#allocation7 + $0x8] sm:$0xf]
        %v662 = vld [vmem:[#allocation7 + $0xc] sm:$0xf]
        %v663 = vld [vmem:[#allocation7 + $0x10] sm:$0xf]
        %v664 = vld [vmem:[#allocation7 + $0x14] sm:$0xf]
        %v665 = vld [vmem:[#allocation7 + $0x18] sm:$0xf]
        %v666 = vld [vmem:[#allocation7 + $0x1c] sm:$0xf]
        %v667 = vld [vmem:[#allocation7 + $0x20] sm:$0xf]
        %v668 = vld [vmem:[#allocation7 + $0x24] sm:$0xf]
        %v669 = vld [vmem:[#allocation7 + $0x28] sm:$0xf]
        %v670 = vld [vmem:[#allocation7 + $0x2c] sm:$0xf]
        %v671 = vld [vmem:[#allocation7 + $0x30] sm:$0xf]
        %v672 = vld [vmem:[#allocation7 + $0x34] sm:$0xf]
        %v673 = vld [vmem:[#allocation7 + $0x38] sm:$0xf]
        %v674 = vld [vmem:[#allocation7 + $0x3c] sm:$0xf]
        %v675 = vld [vmem:[#allocation7 + $0x40] sm:$0xf]
        %v676 = vld [vmem:[#allocation7 + $0x44] sm:$0xf]
        %v677 = vld [vmem:[#allocation7 + $0x48] sm:$0xf]
        %v678 = vld [vmem:[#allocation7 + $0x4c] sm:$0xf]
        %v679 = vld [vmem:[#allocation7 + $0x50] sm:$0xf]
        %v680 = vld [vmem:[#allocation7 + $0x54] sm:$0xf]
        %v681 = vld [vmem:[#allocation7 + $0x58] sm:$0xf]
        %v682 = vld [vmem:[#allocation7 + $0x5c] sm:$0xf]
        %v683 = vld [vmem:[#allocation7 + $0x60] sm:$0xf]
        %v684 = vld [vmem:[#allocation7 + $0x64] sm:$0xf]
        %v685 = vld [vmem:[#allocation7 + $0x68] sm:$0xf]
        %v686 = vld [vmem:[#allocation7 + $0x6c] sm:$0xf]
        %v687 = vld [vmem:[#allocation7 + $0x70] sm:$0xf]
        %v688 = vld [vmem:[#allocation7 + $0x74] sm:$0xf]
        %v689 = vld [vmem:[#allocation7 + $0x78] sm:$0xf]
        %v690 = vld [vmem:[#allocation7 + $0x7c] sm:$0xf]
        %v691 = vld [vmem:[#allocation7 + $0x80] sm:$0xf]
        %v692 = vld [vmem:[#allocation7 + $0x84] sm:$0xf]
        %v693 = vld [vmem:[#allocation7 + $0x88] sm:$0xf]
        %v694 = vld [vmem:[#allocation7 + $0x8c] sm:$0xf]
        %v695 = vld [vmem:[#allocation7 + $0x90] sm:$0xf]
        %v696 = vld [vmem:[#allocation7 + $0x94] sm:$0xf]
        %v697 = vld [vmem:[#allocation7 + $0x98] sm:$0xf]
        %v698 = vld [vmem:[#allocation7 + $0x9c] sm:$0xf]
        %v699 = vld [vmem:[#allocation7 + $0xa0] sm:$0xf]
        %v700 = vld [vmem:[#allocation7 + $0xa4] sm:$0xf]
        %v701 = vld [vmem:[#allocation7 + $0xa8] sm:$0xf]
        %v702 = vld [vmem:[#allocation7 + $0xac] sm:$0xf]
        %v703 = vld [vmem:[#allocation7 + $0xb0] sm:$0xf]
        %v704 = vld [vmem:[#allocation7 + $0xb4] sm:$0xf]
        %v705 = vld [vmem:[#allocation7 + $0xb8] sm:$0xf]
        %v706 = vld [vmem:[#allocation7 + $0xbc] sm:$0xf]
        %v707 = vld [vmem:[#allocation7 + $0xc0] sm:$0xf]
        %v708 = vld [vmem:[#allocation7 + $0xc4] sm:$0xf]
        %v709 = vld [vmem:[#allocation7 + $0xc8] sm:$0xf]
        %v710 = vld [vmem:[#allocation7 + $0xcc] sm:$0xf]
        %v711 = vld [vmem:[#allocation7 + $0xd0] sm:$0xf]
        %v712 = vld [vmem:[#allocation7 + $0xd4] sm:$0xf]
        %v713 = vld [vmem:[#allocation7 + $0xd8] sm:$0xf]
        %v714 = vld [vmem:[#allocation7 + $0xdc] sm:$0xf]
        %v715 = vld [vmem:[#allocation7 + $0xe0] sm:$0xf]
        %v716 = vld [vmem:[#allocation7 + $0xe4] sm:$0xf]
        %v717 = vld [vmem:[#allocation7 + $0xe8] sm:$0xf]
        %v718 = vld [vmem:[#allocation7 + $0xec] sm:$0xf]
        %v719 = vld [vmem:[#allocation7 + $0xf0] sm:$0xf]
        %v720 = vld [vmem:[#allocation7 + $0xf4] sm:$0xf]
        %v721 = vld [vmem:[#allocation7 + $0xf8] sm:$0xf]
        %v722 = vld [vmem:[#allocation7 + $0xfc] sm:$0xf]
        %v723 = vld [vmem:[%s4] sm:$0x1]
        %v725 = vlaneseq
        %v726 = vshrl.u32 %v725, 7
        %v727 = vsub.s32 0, %v726
        %v728 = vrot.slane %v723, %v727
        %v794 = vunpack.c.l.b16 %v659
        %v795 = vunpack.c.l.b16 %v660
        %v796 = vunpack.c.l.b16 %v661
        %v797 = vunpack.c.l.b16 %v662
        %v798 = vunpack.c.l.b16 %v663
        %v799 = vunpack.c.l.b16 %v664
        %v800 = vunpack.c.l.b16 %v665
        %v801 = vunpack.c.l.b16 %v666
        %v802 = vunpack.c.l.b16 %v667
        %v803 = vunpack.c.l.b16 %v668
        %v804 = vunpack.c.l.b16 %v669
        %v805 = vunpack.c.l.b16 %v670
        %v806 = vunpack.c.l.b16 %v671
        %v807 = vunpack.c.l.b16 %v672
        %v808 = vunpack.c.l.b16 %v673
        %v809 = vunpack.c.l.b16 %v674
        %v810 = vunpack.c.l.b16 %v675
        %v811 = vunpack.c.l.b16 %v676
        %v812 = vunpack.c.l.b16 %v677
        %v813 = vunpack.c.l.b16 %v678
        %v814 = vunpack.c.l.b16 %v679
        %v815 = vunpack.c.l.b16 %v680
        %v816 = vunpack.c.l.b16 %v681
        %v817 = vunpack.c.l.b16 %v682
        %v818 = vunpack.c.l.b16 %v683
        %v819 = vunpack.c.l.b16 %v684
        %v820 = vunpack.c.l.b16 %v685
        %v821 = vunpack.c.l.b16 %v686
        %v822 = vunpack.c.l.b16 %v687
        %v823 = vunpack.c.l.b16 %v688
        %v824 = vunpack.c.l.b16 %v689
        %v825 = vunpack.c.l.b16 %v690
        %v826 = vunpack.c.l.b16 %v691
        %v827 = vunpack.c.l.b16 %v692
        %v828 = vunpack.c.l.b16 %v693
        %v829 = vunpack.c.l.b16 %v694
        %v830 = vunpack.c.l.b16 %v695
        %v831 = vunpack.c.l.b16 %v696
        %v832 = vunpack.c.l.b16 %v697
        %v833 = vunpack.c.l.b16 %v698
        %v834 = vunpack.c.l.b16 %v699
        %v835 = vunpack.c.l.b16 %v700
        %v836 = vunpack.c.l.b16 %v701
        %v837 = vunpack.c.l.b16 %v702
        %v838 = vunpack.c.l.b16 %v703
        %v839 = vunpack.c.l.b16 %v704
        %v840 = vunpack.c.l.b16 %v705
        %v841 = vunpack.c.l.b16 %v706
        %v842 = vunpack.c.l.b16 %v707
        %v843 = vunpack.c.l.b16 %v708
        %v844 = vunpack.c.l.b16 %v709
        %v845 = vunpack.c.l.b16 %v710
        %v846 = vunpack.c.l.b16 %v711
        %v847 = vunpack.c.l.b16 %v712
        %v848 = vunpack.c.l.b16 %v713
        %v849 = vunpack.c.l.b16 %v714
        %v850 = vunpack.c.l.b16 %v715
        %v851 = vunpack.c.l.b16 %v716
        %v852 = vunpack.c.l.b16 %v717
        %v853 = vunpack.c.l.b16 %v718
        %v854 = vunpack.c.l.b16 %v719
        %v855 = vunpack.c.l.b16 %v720
        %v856 = vunpack.c.l.b16 %v721
        %v857 = vunpack.c.l.b16 %v722
        %v858 = vpack.c.b16 %v795, %v794
        %v859 = vpack.c.b16 %v797, %v796
        %v860 = vpack.c.b16 %v799, %v798
        %v861 = vpack.c.b16 %v801, %v800
        %v862 = vpack.c.b16 %v803, %v802
        %v863 = vpack.c.b16 %v805, %v804
        %v864 = vpack.c.b16 %v807, %v806
        %v865 = vpack.c.b16 %v809, %v808
        %v866 = vpack.c.b16 %v811, %v810
        %v867 = vpack.c.b16 %v813, %v812
        %v868 = vpack.c.b16 %v815, %v814
        %v869 = vpack.c.b16 %v817, %v816
        %v870 = vpack.c.b16 %v819, %v818
        %v871 = vpack.c.b16 %v821, %v820
        %v872 = vpack.c.b16 %v823, %v822
        %v873 = vpack.c.b16 %v825, %v824
        %v874 = vpack.c.b16 %v827, %v826
        %v875 = vpack.c.b16 %v829, %v828
        %v876 = vpack.c.b16 %v831, %v830
        %v877 = vpack.c.b16 %v833, %v832
        %v878 = vpack.c.b16 %v835, %v834
        %v879 = vpack.c.b16 %v837, %v836
        %v880 = vpack.c.b16 %v839, %v838
        %v881 = vpack.c.b16 %v841, %v840
        %v882 = vpack.c.b16 %v843, %v842
        %v883 = vpack.c.b16 %v845, %v844
        %v884 = vpack.c.b16 %v847, %v846
        %v885 = vpack.c.b16 %v849, %v848
        %v886 = vpack.c.b16 %v851, %v850
        %v887 = vpack.c.b16 %v853, %v852
        %v888 = vpack.c.b16 %v855, %v854
        %v889 = vpack.c.b16 %v857, %v856
        %922 = vmatprep.subr.bf16.mxu0 0
        %923 = vmatpush1.bf16.msra.mxu0 %v858
        %924 = vmatprep.subr.bf16.mxu0 0
        %925 = vmatpush1.bf16.msra.mxu0 %v859
        %926 = vmatprep.subr.bf16.mxu0 0
        %927 = vmatpush1.bf16.msra.mxu0 %v860
        %928 = vmatprep.subr.bf16.mxu0 0
        %929 = vmatpush1.bf16.msra.mxu0 %v861
        %930 = vmatprep.subr.bf16.mxu0 0
        %931 = vmatpush1.bf16.msra.mxu0 %v862
        %932 = vmatprep.subr.bf16.mxu0 0
        %933 = vmatpush1.bf16.msra.mxu0 %v863
        %934 = vmatprep.subr.bf16.mxu0 0
        %935 = vmatpush1.bf16.msra.mxu0 %v864
        %936 = vmatprep.subr.bf16.mxu0 0
        %937 = vmatpush1.bf16.msra.mxu0 %v865
        %938 = vmatprep.subr.bf16.mxu0 0
        %939 = vmatpush1.bf16.msra.mxu0 %v866
        %940 = vmatprep.subr.bf16.mxu0 0
        %941 = vmatpush1.bf16.msra.mxu0 %v867
        %942 = vmatprep.subr.bf16.mxu0 0
        %943 = vmatpush1.bf16.msra.mxu0 %v868
        %944 = vmatprep.subr.bf16.mxu0 0
        %945 = vmatpush1.bf16.msra.mxu0 %v869
        %946 = vmatprep.subr.bf16.mxu0 0
        %947 = vmatpush1.bf16.msra.mxu0 %v870
        %948 = vmatprep.subr.bf16.mxu0 0
        %949 = vmatpush1.bf16.msra.mxu0 %v871
        %950 = vmatprep.subr.bf16.mxu0 0
        %951 = vmatpush1.bf16.msra.mxu0 %v872
        %952 = vmatprep.subr.bf16.mxu0 0
        %953 = vmatpush1.bf16.msra.mxu0 %v873
        %954 = vmatprep.mubr.bf16.mxu0 %v656
        %955 = vmatmul.mubr.bf16.gmra.mrb[0].mxu0 %v655
        %v956 = vpop.f32.mrb[0].mxu0
        %v957 = vadd.f32 %v728, %v956
        %v958 = vpop.f32.mrb[0].mxu0
        %v959 = vpop.f32.mrb[0].mxu0
        %v960 = vpop.f32.mrb[0].mxu0
        %961 = vdwg.mxu0
        %962 = vmatprep.subr.bf16.mxu0 0
        %963 = vmatpush1.bf16.msra.mxu0 %v874
        %964 = vmatprep.subr.bf16.mxu0 0
        %965 = vmatpush1.bf16.msra.mxu0 %v875
        %966 = vmatprep.subr.bf16.mxu0 0
        %967 = vmatpush1.bf16.msra.mxu0 %v876
        %968 = vmatprep.subr.bf16.mxu0 0
        %969 = vmatpush1.bf16.msra.mxu0 %v877
        %970 = vmatprep.subr.bf16.mxu0 0
        %971 = vmatpush1.bf16.msra.mxu0 %v878
        %972 = vmatprep.subr.bf16.mxu0 0
        %973 = vmatpush1.bf16.msra.mxu0 %v879
        %974 = vmatprep.subr.bf16.mxu0 0
        %975 = vmatpush1.bf16.msra.mxu0 %v880
        %976 = vmatprep.subr.bf16.mxu0 0
        %977 = vmatpush1.bf16.msra.mxu0 %v881
        %978 = vmatprep.subr.bf16.mxu0 0
        %979 = vmatpush1.bf16.msra.mxu0 %v882
        %980 = vmatprep.subr.bf16.mxu0 0
        %981 = vmatpush1.bf16.msra.mxu0 %v883
        %982 = vmatprep.subr.bf16.mxu0 0
        %983 = vmatpush1.bf16.msra.mxu0 %v884
        %984 = vmatprep.subr.bf16.mxu0 0
        %985 = vmatpush1.bf16.msra.mxu0 %v885
        %986 = vmatprep.subr.bf16.mxu0 0
        %987 = vmatpush1.bf16.msra.mxu0 %v886
        %988 = vmatprep.subr.bf16.mxu0 0
        %989 = vmatpush1.bf16.msra.mxu0 %v887
        %990 = vmatprep.subr.bf16.mxu0 0
        %991 = vmatpush1.bf16.msra.mxu0 %v888
        %992 = vmatprep.subr.bf16.mxu0 0
        %993 = vmatpush1.bf16.msra.mxu0 %v889
        %994 = vmatprep.mubr.bf16.mxu0 %v658
        %995 = vmatmul.mubr.bf16.gmra.mrb[0].mxu0 %v657
        %v996 = vpop.f32.mrb[0].mxu0
        %v997 = vadd.f32 %v957, %v996
        %v998 = vpop.f32.mrb[0].mxu0
        %v999 = vpop.f32.mrb[0].mxu0
        %v1000 = vpop.f32.mrb[0].mxu0
        %1001 = vdwg.mxu0
        %1002 = vst [vmem:[%s268] sm:$0xff] %v997
        %s1003 = sand.u32 %s141, 1
        %s1004 = scalar_lea.sflag [#allocation4], %s1003
        %s1005 = sand.u32 %s141, 1
        %s1006 = smul.addr %s1005, 8
        %s1007 = scalar_lea.vmem [#allocation8], %s1006
        // Predicated region
        $region53: #{tpu_custom_call.1} parent=39 // pred_check
          %p1008 = pneg %p151
        $region54: #{tpu_custom_call.1} parent=39 // pred_check_branch
          %1010 = sbr.rel (%p1008) target = $region56
        $region55: #{tpu_custom_call.1} parent=39 // pred_region
          %s1012 = ssub.s32 128, 128
          %1013 = vsyncadd %s1004, %s1012
          %s1014 = smul.addr %s23, 128
          %s1015 = scalar_lea.hbm %s5, %s1014
          %s1017 = sshll.u32 %s1007, 4
          %s1018 = int_to_ptr.vmem [resolvable:$true] %s1017
          %1020 = dma.vmem_to_hbm [thread:$0]  %s1018, 128, %s1015, %s1004
        $region56: #{tpu_custom_call.1} parent=39 // pred_fallthru
          _
      $region40: #{tpu_custom_call.1} parent=5 // pred_fallthru
        _
      %p1021 = scmp.le.s32.totalorder 2, %s18
      // Predicated region
      $region57: #{tpu_custom_call.1} parent=5 // pred_check
        %p1022 = pneg %p1021
      $region58: #{tpu_custom_call.1} parent=5 // pred_check_branch
        %1024 = sbr.rel (%p1022) target = $region60
      $region59: #{tpu_custom_call.1} parent=5 // pred_region
        %s1025 = ssub.s32 %s18, 2
        // Predicated region
        $region61: #{tpu_custom_call.1} parent=59 // pred_check
          %p1026 = pneg %p157
        $region62: #{tpu_custom_call.1} parent=59 // pred_check_branch
          %1028 = sbr.rel (%p1026) target = $region64
        $region63: #{tpu_custom_call.1} parent=59 // pred_region
          %s1029 = sand.u32 %s142, 1
          %s1030 = scalar_lea.sflag [#allocation4], %s1029
          %s1031 = sand.u32 %s142, 1
          %s1032 = smul.addr %s1031, 8
          %s1033 = scalar_lea.vmem [#allocation8], %s1032
          %1034 = dma.done %s1030, 128
        $region64: #{tpu_custom_call.1} parent=59 // pred_fallthru
          _
      $region60: #{tpu_custom_call.1} parent=5 // pred_fallthru
        _
    $region6: #{tpu_custom_call.1} parent=1 // loop_footer
      %s22 = sadd.s32 1, %s18
    $region7: #{tpu_custom_call.1} parent=1 // loop_footer_branch
      %17 = sbr.rel target = $region3
    $region8: #{tpu_custom_call.1} parent=1 // loop_exit
      _
    %1035 = vsyncpa [#allocation3], 1
    %s1036 = scalar_lea.sflag [#allocation3], 1
    %1037 = vsyncpa %s1036, 1
    %1038 = vsyncpa [#allocation6], 1
    %1039 = vsyncpa [#allocation4], 1
    %s1040 = scalar_lea.sflag [#allocation4], 1
    %1041 = vsyncpa %s1040, 1

// kernel: tpu_custom_call.1
$region0: #{tpu_custom_call.1}
  #allocation0 [shape = 'u32[]', space=smem, size = 0x4, offset = 0x4, fixed_abs, tag = 'smem constant byte address 0x4 - core index']
  #allocation1 [shape = 'u32[144,128]{1,0:T(1,128)}', space=vmem, size = 0x12000, scoped, tag = 'internal scratch']
  %s0 = inlined_call_operand.hbm [shape: bf16[16,128], index: 0, kind: input, shape index: {}]
  %s1 = inlined_call_operand.hbm [shape: bf16[128,512], index: 1, kind: input, shape index: {}]
  %s2 = inlined_call_operand.vmem [shape: f32[1,512], index: 2, kind: input, shape index: {}]
  %s3 = inlined_call_operand.hbm [shape: bf16[512,128], index: 3, kind: input, shape index: {}]
  %s4 = inlined_call_operand.vmem [shape: f32[1,128], index: 4, kind: input, shape index: {}]
  %s5 = inlined_call_operand.hbm [shape: f32[16,128], index: 5, kind: output, shape index: {}]
  %s6 = sld [smem:[#allocation0]]
  $region65: #{tpu_custom_call.1} parent=0
    _
  %s8 = ssub.s32 1, %s6
  %s9 = scalar_select 0, %s8, %s6
  $region1: #{tpu_custom_call.1} parent=0
    #allocation2 [shape = 'u8[4096]{0}', space=vmem, size = 0x1000, scoped, tag = 'input window, operand 0']
    #allocation3 [shape = 's32[2]{0}', space=sflag, size = 0x8, scoped, tag = 'scoped memory for tpu_custom_call.1']
    #allocation4 [shape = 's32[2]{0}', space=sflag, size = 0x8, scoped, tag = 'scoped memory for tpu_custom_call.1']
    #allocation5 [shape = 'u8[131072]{0}', space=vmem, size = 0x20000, scoped, tag = 'input window, operand 1, single buffered']
    #allocation6 [shape = 's32[1]{0}', space=sflag, size = 0x4, scoped, tag = 'scoped memory for tpu_custom_call.1']
    #allocation7 [shape = 'u8[131072]{0}', space=vmem, size = 0x20000, scoped, tag = 'input window, operand 3, single buffered']
    #allocation8 [shape = 'u8[8192]{0}', space=vmem, size = 0x2000, scoped, tag = 'output window, operand 0']
    %10 = vsyncpa [#allocation3], 0
    %s11 = scalar_lea.sflag [#allocation3], 1
    %12 = vsyncpa %s11, 0
    %13 = vsyncpa [#allocation6], 0
    %14 = vsyncpa [#allocation4], 0
    %s15 = scalar_lea.sflag [#allocation4], 1
    %16 = vsyncpa %s15, 0
    loop: start=0, step=1, limit=4
    $region2: #{tpu_custom_call.1} parent=1 // loop_pre_header
      _
    $region3: #{tpu_custom_call.1} parent=1 // loop_header
      %s18 = sphi 0, %s22
      %p19 = scmp.ge.s32.totalorder %s18, 4
      %s28 = sphi 0, %s30
      %s31 = sphi 0, %s28
      %s32 = sphi 0, %s31
      %s48 = sphi 0, %s32
      %s52 = sphi 0, %s52
      %s54 = sphi 0, %s52
      %s55 = sphi 0, %s54
      %s69 = sphi 0, %s55
      %s73 = sphi 0, %s73
      %s75 = sphi 0, %s73
      %s76 = sphi 0, %s75
      %s90 = sphi 0, %s76
      %s94 = sphi 0, %s94
      %s96 = sphi 0, %s94
      %s97 = sphi 0, %s96
      %s111 = sphi 0, %s97
      %s115 = sphi 0, %s115
      %s117 = sphi 0, %s115
      %s118 = sphi 0, %s117
      %s132 = sphi 0, %s118
      %s138 = sphi 0, %s140
      %s141 = sphi 0, %s138
      %s142 = sphi 0, %s141
      %s158 = sphi 0, %s142
    $region4: #{tpu_custom_call.1} parent=1 // loop_header_branch
      %21 = sbr.rel (%p19) target = $region8
    $region5: #{tpu_custom_call.1} parent=1 // loop_body
      %s23 = ssub.s32 %s18, 1
      %s24 = ssub.s32 %s18, 2
      %s25 = sadd.s32 %s18, 1
      %s26 = ssub.s32 %s18, %s25
      %p27 = scmp.eq.s32.totalorder %s26, 0
      %s29 = sadd.s32 %s28, 1
      %s30 = scalar_select %p27, %s28, %s29
      %p33 = pneg %p27
      %p34 = scmp.eq.s32.totalorder %s18, 1
      %p35 = por %p33, %p34
      %p36 = scmp.ne.s32.totalorder %s28, %s31
      %p37 = scmp.eq.s32.totalorder %s18, 0
      %p38 = por %p36, %p37
      %p39 = scmp.ne.s32.totalorder %s28, %s31
      %p40 = scmp.eq.s32.totalorder %s23, 1
      %p41 = por %p39, %p40
      %p42 = scmp.ne.s32.totalorder %s31, %s32
      %p43 = scmp.eq.s32.totalorder %s23, 0
      %p44 = por %p42, %p43
      %p45 = scmp.ne.s32.totalorder %s31, %s32
      %p46 = scmp.eq.s32.totalorder %s24, 1
      %p47 = por %p45, %p46
      %p49 = scmp.ne.s32.totalorder %s32, %s48
      %p50 = scmp.eq.s32.totalorder %s24, 0
      %p51 = por %p49, %p50
      %s53 = sadd.s32 %s52, 1
      %p56 = scmp.eq.s32.totalorder %s18, 1
      %p57 = scmp.ne.s32.totalorder %s52, %s54
      %p58 = scmp.eq.s32.totalorder %s18, 0
      %p59 = por %p57, %p58
      %p60 = scmp.ne.s32.totalorder %s52, %s54
      %p61 = scmp.eq.s32.totalorder %s23, 1
      %p62 = por %p60, %p61
      %p63 = scmp.ne.s32.totalorder %s54, %s55
      %p64 = scmp.eq.s32.totalorder %s23, 0
      %p65 = por %p63, %p64
      %p66 = scmp.ne.s32.totalorder %s54, %s55
      %p67 = scmp.eq.s32.totalorder %s24, 1
      %p68 = por %p66, %p67
      %p70 = scmp.ne.s32.totalorder %s55, %s69
      %p71 = scmp.eq.s32.totalorder %s24, 0
      %p72 = por %p70, %p71
      %s74 = sadd.s32 %s73, 1
      %p77 = scmp.eq.s32.totalorder %s18, 1
      %p78 = scmp.ne.s32.totalorder %s73, %s75
      %p79 = scmp.eq.s32.totalorder %s18, 0
      %p80 = por %p78, %p79
      %p81 = scmp.ne.s32.totalorder %s73, %s75
      %p82 = scmp.eq.s32.totalorder %s23, 1
      %p83 = por %p81, %p82
      %p84 = scmp.ne.s32.totalorder %s75, %s76
      %p85 = scmp.eq.s32.totalorder %s23, 0
      %p86 = por %p84, %p85
      %p87 = scmp.ne.s32.totalorder %s75, %s76
      %p88 = scmp.eq.s32.totalorder %s24, 1
      %p89 = por %p87, %p88
      %p91 = scmp.ne.s32.totalorder %s76, %s90
      %p92 = scmp.eq.s32.totalorder %s24, 0
      %p93 = por %p91, %p92
      %s95 = sadd.s32 %s94, 1
      %p98 = scmp.eq.s32.totalorder %s18, 1
      %p99 = scmp.ne.s32.totalorder %s94, %s96
      %p100 = scmp.eq.s32.totalorder %s18, 0
      %p101 = por %p99, %p100
      %p102 = scmp.ne.s32.totalorder %s94, %s96
      %p103 = scmp.eq.s32.totalorder %s23, 1
      %p104 = por %p102, %p103
      %p105 = scmp.ne.s32.totalorder %s96, %s97
      %p106 = scmp.eq.s32.totalorder %s23, 0
      %p107 = por %p105, %p106
      %p108 = scmp.ne.s32.totalorder %s96, %s97
      %p109 = scmp.eq.s32.totalorder %s24, 1
      %p110 = por %p108, %p109
      %p112 = scmp.ne.s32.totalorder %s97, %s111
      %p113 = scmp.eq.s32.totalorder %s24, 0
      %p114 = por %p112, %p113
      %s116 = sadd.s32 %s115, 1
      %p119 = scmp.eq.s32.totalorder %s18, 1
      %p120 = scmp.ne.s32.totalorder %s115, %s117
      %p121 = scmp.eq.s32.totalorder %s18, 0
      %p122 = por %p120, %p121
      %p123 = scmp.ne.s32.totalorder %s115, %s117
      %p124 = scmp.eq.s32.totalorder %s23, 1
      %p125 = por %p123, %p124
      %p126 = scmp.ne.s32.totalorder %s117, %s118
      %p127 = scmp.eq.s32.totalorder %s23, 0
      %p128 = por %p126, %p127
      %p129 = scmp.ne.s32.totalorder %s117, %s118
      %p130 = scmp.eq.s32.totalorder %s24, 1
      %p131 = por %p129, %p130
      %p133 = scmp.ne.s32.totalorder %s118, %s132
      %p134 = scmp.eq.s32.totalorder %s24, 0
      %p135 = por %p133, %p134
      %s136 = ssub.s32 %s18, %s25
      %p137 = scmp.eq.s32.totalorder %s136, 0
      %s139 = sadd.s32 %s138, 1
      %s140 = scalar_select %p137, %s138, %s139
      %p143 = pneg %p137
      %p144 = scmp.eq.s32.totalorder %s18, 1
      %p145 = por %p143, %p144
      %p146 = scmp.ne.s32.totalorder %s138, %s141
      %p147 = scmp.eq.s32.totalorder %s18, 0
      %p148 = por %p146, %p147
      %p149 = scmp.ne.s32.totalorder %s138, %s141
      %p150 = scmp.eq.s32.totalorder %s23, 1
      %p151 = por %p149, %p150
      %p152 = scmp.ne.s32.totalorder %s141, %s142
      %p153 = scmp.eq.s32.totalorder %s23, 0
      %p154 = por %p152, %p153
      %p155 = scmp.ne.s32.totalorder %s141, %s142
      %p156 = scmp.eq.s32.totalorder %s24, 1
      %p157 = por %p155, %p156
      %p159 = scmp.ne.s32.totalorder %s142, %s158
      %p160 = scmp.eq.s32.totalorder %s24, 0
      %p161 = por %p159, %p160
      %p162 = scmp.le.s32.totalorder 1, %s18
      %p163 = scmp.lt.s32.totalorder %s18, 3
      %p164 = pnand %p162, %p163
      %p165 = pneg %p164
      // Predicated region
      $region9: #{tpu_custom_call.1} parent=5 // pred_check
        _
      $region10: #{tpu_custom_call.1} parent=5 // pred_check_branch
        %167 = sbr.rel (%p164) target = $region12
      $region11: #{tpu_custom_call.1} parent=5 // pred_region
        %s168 = ssub.s32 %s18, 1
        // Predicated region
        $region13: #{tpu_custom_call.1} parent=11 // pred_check
          %p169 = pneg %p65
        $region14: #{tpu_custom_call.1} parent=11 // pred_check_branch
          %171 = sbr.rel (%p169) target = $region16
        $region15: #{tpu_custom_call.1} parent=11 // pred_region
          %s173 = ssub.s32 4096, 4096
          %174 = vsyncadd [#allocation6], %s173
          %s175 = sshll.u32 [#allocation5], 4
          %s176 = int_to_ptr.vmem [resolvable:$true] %s175
          %181 = dma.hbm_to_vmem [thread:$0]  %s1, 4096, %s176, [#allocation6], 256, 256, 16
        $region16: #{tpu_custom_call.1} parent=11 // pred_fallthru
          _
        // Predicated region
        $region17: #{tpu_custom_call.1} parent=11 // pred_check
          %p182 = pneg %p86
        $region18: #{tpu_custom_call.1} parent=11 // pred_check_branch
          %184 = sbr.rel (%p182) target = $region20
        $region19: #{tpu_custom_call.1} parent=11 // pred_region
          _
        $region20: #{tpu_custom_call.1} parent=11 // pred_fallthru
          _
        // Predicated region
        $region21: #{tpu_custom_call.1} parent=11 // pred_check
          %p185 = pneg %p107
        $region22: #{tpu_custom_call.1} parent=11 // pred_check_branch
          %187 = sbr.rel (%p185) target = $region24
        $region23: #{tpu_custom_call.1} parent=11 // pred_region
          %s189 = ssub.s32 4096, 4096
          %190 = vsyncadd [#allocation6], %s189
          %s191 = sshll.u32 [#allocation7], 4
          %s192 = int_to_ptr.vmem [resolvable:$true] %s191
          %197 = dma.hbm_to_vmem [thread:$0]  %s3, 4096, %s192, [#allocation6], 64, 64, 4
        $region24: #{tpu_custom_call.1} parent=11 // pred_fallthru
          _
        // Predicated region
        $region25: #{tpu_custom_call.1} parent=11 // pred_check
          %p198 = pneg %p128
        $region26: #{tpu_custom_call.1} parent=11 // pred_check_branch
          %200 = sbr.rel (%p198) target = $region28
        $region27: #{tpu_custom_call.1} parent=11 // pred_region
          _
        $region28: #{tpu_custom_call.1} parent=11 // pred_fallthru
          _
      $region12: #{tpu_custom_call.1} parent=5 // pred_fallthru
        _
      %p201 = scmp.lt.s32.totalorder %s18, 2
      // Predicated region
      $region29: #{tpu_custom_call.1} parent=5 // pred_check
        %p202 = pneg %p201
      $region30: #{tpu_custom_call.1} parent=5 // pred_check_branch
        %204 = sbr.rel (%p202) target = $region32
      $region31: #{tpu_custom_call.1} parent=5 // pred_region
        // Predicated region
        $region33: #{tpu_custom_call.1} parent=31 // pred_check
          %p205 = pneg %p38
        $region34: #{tpu_custom_call.1} parent=31 // pred_check_branch
          %207 = sbr.rel (%p205) target = $region36
        $region35: #{tpu_custom_call.1} parent=31 // pred_region
          %s208 = sand.u32 %s28, 1
          %s209 = scalar_lea.sflag [#allocation3], %s208
          %s210 = sand.u32 %s28, 1
          %s211 = smul.addr %s210, 4
          %s212 = scalar_lea.vmem [#allocation2], %s211
          %s214 = ssub.s32 64, 64
          %215 = vsyncadd %s209, %s214
          %s216 = smul.addr %s18, 64
          %s217 = scalar_lea.hbm %s0, %s216
          %s219 = sshll.u32 %s212, 4
          %s220 = int_to_ptr.vmem [resolvable:$true] %s219
          %222 = dma.hbm_to_vmem [thread:$0]  %s217, 64, %s220, %s209
        $region36: #{tpu_custom_call.1} parent=31 // pred_fallthru
          _
      $region32: #{tpu_custom_call.1} parent=5 // pred_fallthru
        _
      %p223 = scmp.le.s32.totalorder 1, %s18
      %p224 = scmp.lt.s32.totalorder %s18, 3
      %p225 = pnand %p223, %p224
      %p226 = pneg %p225
      // Predicated region
      $region37: #{tpu_custom_call.1} parent=5 // pred_check
        _
      $region38: #{tpu_custom_call.1} parent=5 // pred_check_branch
        %228 = sbr.rel (%p225) target = $region40
      $region39: #{tpu_custom_call.1} parent=5 // pred_region
        %s229 = ssub.s32 %s18, 1
        %s230 = sand.u32 %s31, 1
        %s231 = scalar_lea.sflag [#allocation3], %s230
        %s232 = sand.u32 %s31, 1
        %s233 = smul.addr %s232, 4
        %s234 = scalar_lea.vmem [#allocation2], %s233
        // Predicated region
        $region41: #{tpu_custom_call.1} parent=39 // pred_check
          %p235 = pneg %p44
        $region42: #{tpu_custom_call.1} parent=39 // pred_check_branch
          %237 = sbr.rel (%p235) target = $region44
        $region43: #{tpu_custom_call.1} parent=39 // pred_region
          %238 = dma.done %s231, 64
        $region44: #{tpu_custom_call.1} parent=39 // pred_fallthru
          _
        // Predicated region
        $region45: #{tpu_custom_call.1} parent=39 // pred_check
          %p239 = pneg %p65
        $region46: #{tpu_custom_call.1} parent=39 // pred_check_branch
          %241 = sbr.rel (%p239) target = $region48
        $region47: #{tpu_custom_call.1} parent=39 // pred_region
          %242 = dma.done [#allocation6], 4096
        $region48: #{tpu_custom_call.1} parent=39 // pred_fallthru
          _
        // Predicated region
        $region49: #{tpu_custom_call.1} parent=39 // pred_check
          %p243 = pneg %p107
        $region50: #{tpu_custom_call.1} parent=39 // pred_check_branch
          %245 = sbr.rel (%p243) target = $region52
        $region51: #{tpu_custom_call.1} parent=39 // pred_region
          %246 = dma.done [#allocation6], 4096
        $region52: #{tpu_custom_call.1} parent=39 // pred_fallthru
          _
        %s247 = sand.u32 %s31, 1
        %s248 = scalar_lea.sflag [#allocation3], %s247
        %s249 = sand.u32 %s31, 1
        %s250 = smul.addr %s249, 4
        %s251 = scalar_lea.vmem [#allocation2], %s250
        %p252 = pneg %p44
        %p253 = pneg %p41
        %p254 = pneg %p65
        %p255 = pneg %p62
        %p256 = pneg %p86
        %p257 = pneg %p83
        %p258 = pneg %p107
        %p259 = pneg %p104
        %p260 = pneg %p128
        %p261 = pneg %p125
        %p262 = pneg %p154
        %p263 = pneg %p151
        %s264 = sand.u32 %s141, 1
        %s265 = scalar_lea.sflag [#allocation4], %s264
        %s266 = sand.u32 %s141, 1
        %s267 = smul.addr %s266, 8
        %s268 = scalar_lea.vmem [#allocation8], %s267
        %v270 = vld [vmem:[%s234] sm:$0xf]
        %v271 = vld [vmem:[#allocation5] sm:$0xff]
        %v272 = vld [vmem:[#allocation5 + $0x8] sm:$0xff]
        %v273 = vld [vmem:[#allocation5 + $0x10] sm:$0xff]
        %v274 = vld [vmem:[#allocation5 + $0x18] sm:$0xff]
        %v275 = vld [vmem:[#allocation5 + $0x20] sm:$0xff]
        %v276 = vld [vmem:[#allocation5 + $0x28] sm:$0xff]
        %v277 = vld [vmem:[#allocation5 + $0x30] sm:$0xff]
        %v278 = vld [vmem:[#allocation5 + $0x38] sm:$0xff]
        %v279 = vld [vmem:[#allocation5 + $0x40] sm:$0xff]
        %v280 = vld [vmem:[#allocation5 + $0x48] sm:$0xff]
        %v281 = vld [vmem:[#allocation5 + $0x50] sm:$0xff]
        %v282 = vld [vmem:[#allocation5 + $0x58] sm:$0xff]
        %v283 = vld [vmem:[#allocation5 + $0x60] sm:$0xff]
        %v284 = vld [vmem:[#allocation5 + $0x68] sm:$0xff]
        %v285 = vld [vmem:[#allocation5 + $0x70] sm:$0xff]
        %v286 = vld [vmem:[#allocation5 + $0x78] sm:$0xff]
        %v287 = vld [vmem:[#allocation5 + $0x80] sm:$0xff]
        %v288 = vld [vmem:[#allocation5 + $0x88] sm:$0xff]
        %v289 = vld [vmem:[#allocation5 + $0x90] sm:$0xff]
        %v290 = vld [vmem:[#allocation5 + $0x98] sm:$0xff]
        %v291 = vld [vmem:[#allocation5 + $0xa0] sm:$0xff]
        %v292 = vld [vmem:[#allocation5 + $0xa8] sm:$0xff]
        %v293 = vld [vmem:[#allocation5 + $0xb0] sm:$0xff]
        %v294 = vld [vmem:[#allocation5 + $0xb8] sm:$0xff]
        %v295 = vld [vmem:[#allocation5 + $0xc0] sm:$0xff]
        %v296 = vld [vmem:[#allocation5 + $0xc8] sm:$0xff]
        %v297 = vld [vmem:[#allocation5 + $0xd0] sm:$0xff]
        %v298 = vld [vmem:[#allocation5 + $0xd8] sm:$0xff]
        %v299 = vld [vmem:[#allocation5 + $0xe0] sm:$0xff]
        %v300 = vld [vmem:[#allocation5 + $0xe8] sm:$0xff]
        %v301 = vld [vmem:[#allocation5 + $0xf0] sm:$0xff]
        %v302 = vld [vmem:[#allocation5 + $0xf8] sm:$0xff]
        %v303 = vld [vmem:[%s2] sm:$0xf]
        %v305 = vlaneseq
        %v306 = vshrl.u32 %v305, 7
        %v307 = vsub.s32 0, %v306
        %v308 = vrot.slane %v303, %v307
        %v309 = vlaneseq
        %v310 = vshrl.u32 %v309, 7
        %v311 = vsub.s32 1, %v310
        %v312 = vrot.slane %v303, %v311
        %v313 = vlaneseq
        %v314 = vshrl.u32 %v313, 7
        %v315 = vsub.s32 2, %v314
        %v316 = vrot.slane %v303, %v315
        %v317 = vlaneseq
        %v318 = vshrl.u32 %v317, 7
        %v319 = vsub.s32 3, %v318
        %v320 = vrot.slane %v303, %v319
        %v357 = vunpack.c.l.b16 %v271
        %v358 = vunpack.c.h.b16 %v271
        %v359 = vunpack.c.l.b16 %v272
        %v360 = vunpack.c.h.b16 %v272
        %v361 = vunpack.c.l.b16 %v273
        %v362 = vunpack.c.h.b16 %v273
        %v363 = vunpack.c.l.b16 %v274
        %v364 = vunpack.c.h.b16 %v274
        %v365 = vunpack.c.l.b16 %v275
        %v366 = vunpack.c.h.b16 %v275
        %v367 = vunpack.c.l.b16 %v276
        %v368 = vunpack.c.h.b16 %v276
        %v369 = vunpack.c.l.b16 %v277
        %v370 = vunpack.c.h.b16 %v277
        %v371 = vunpack.c.l.b16 %v278
        %v372 = vunpack.c.h.b16 %v278
        %v373 = vunpack.c.l.b16 %v279
        %v374 = vunpack.c.h.b16 %v279
        %v375 = vunpack.c.l.b16 %v280
        %v376 = vunpack.c.h.b16 %v280
        %v377 = vunpack.c.l.b16 %v281
        %v378 = vunpack.c.h.b16 %v281
        %v379 = vunpack.c.l.b16 %v282
        %v380 = vunpack.c.h.b16 %v282
        %v381 = vunpack.c.l.b16 %v283
        %v382 = vunpack.c.h.b16 %v283
        %v383 = vunpack.c.l.b16 %v284
        %v384 = vunpack.c.h.b16 %v284
        %v385 = vunpack.c.l.b16 %v285
        %v386 = vunpack.c.h.b16 %v285
        %v387 = vunpack.c.l.b16 %v286
        %v388 = vunpack.c.h.b16 %v286
        %v389 = vunpack.c.l.b16 %v287
        %v390 = vunpack.c.h.b16 %v287
        %v391 = vunpack.c.l.b16 %v288
        %v392 = vunpack.c.h.b16 %v288
        %v393 = vunpack.c.l.b16 %v289
        %v394 = vunpack.c.h.b16 %v289
        %v395 = vunpack.c.l.b16 %v290
        %v396 = vunpack.c.h.b16 %v290
        %v397 = vunpack.c.l.b16 %v291
        %v398 = vunpack.c.h.b16 %v291
        %v399 = vunpack.c.l.b16 %v292
        %v400 = vunpack.c.h.b16 %v292
        %v401 = vunpack.c.l.b16 %v293
        %v402 = vunpack.c.h.b16 %v293
        %v403 = vunpack.c.l.b16 %v294
        %v404 = vunpack.c.h.b16 %v294
        %v405 = vunpack.c.l.b16 %v295
        %v406 = vunpack.c.h.b16 %v295
        %v407 = vunpack.c.l.b16 %v296
        %v408 = vunpack.c.h.b16 %v296
        %v409 = vunpack.c.l.b16 %v297
        %v410 = vunpack.c.h.b16 %v297
        %v411 = vunpack.c.l.b16 %v298
        %v412 = vunpack.c.h.b16 %v298
        %v413 = vunpack.c.l.b16 %v299
        %v414 = vunpack.c.h.b16 %v299
        %v415 = vunpack.c.l.b16 %v300
        %v416 = vunpack.c.h.b16 %v300
        %v417 = vunpack.c.l.b16 %v301
        %v418 = vunpack.c.h.b16 %v301
        %v419 = vunpack.c.l.b16 %v302
        %v420 = vunpack.c.h.b16 %v302
        %v421 = vpack.c.b16 %v361, %v357
        %v422 = vpack.c.b16 %v362, %v358
        %v423 = vpack.c.b16 %v363, %v359
        %v424 = vpack.c.b16 %v364, %v360
        %v425 = vpack.c.b16 %v369, %v365
        %v426 = vpack.c.b16 %v370, %v366
        %v427 = vpack.c.b16 %v371, %v367
        %v428 = vpack.c.b16 %v372, %v368
        %v429 = vpack.c.b16 %v377, %v373
        %v430 = vpack.c.b16 %v378, %v374
        %v431 = vpack.c.b16 %v379, %v375
        %v432 = vpack.c.b16 %v380, %v376
        %v433 = vpack.c.b16 %v385, %v381
        %v434 = vpack.c.b16 %v386, %v382
        %v435 = vpack.c.b16 %v387, %v383
        %v436 = vpack.c.b16 %v388, %v384
        %v437 = vpack.c.b16 %v393, %v389
        %v438 = vpack.c.b16 %v394, %v390
        %v439 = vpack.c.b16 %v395, %v391
        %v440 = vpack.c.b16 %v396, %v392
        %v441 = vpack.c.b16 %v401, %v397
        %v442 = vpack.c.b16 %v402, %v398
        %v443 = vpack.c.b16 %v403, %v399
        %v444 = vpack.c.b16 %v404, %v400
        %v445 = vpack.c.b16 %v409, %v405
        %v446 = vpack.c.b16 %v410, %v406
        %v447 = vpack.c.b16 %v411, %v407
        %v448 = vpack.c.b16 %v412, %v408
        %v449 = vpack.c.b16 %v417, %v413
        %v450 = vpack.c.b16 %v418, %v414
        %v451 = vpack.c.b16 %v419, %v415
        %v452 = vpack.c.b16 %v420, %v416
        %485 = vmatprep.subr.bf16.mxu0 %v422
        %486 = vmatpush1.bf16.msra.mxu0 %v421
        %487 = vmatprep.subr.bf16.mxu0 %v426
        %488 = vmatpush1.bf16.msra.mxu0 %v425
        %489 = vmatprep.subr.bf16.mxu0 %v430
        %490 = vmatpush1.bf16.msra.mxu0 %v429
        %491 = vmatprep.subr.bf16.mxu0 %v434
        %492 = vmatpush1.bf16.msra.mxu0 %v433
        %493 = vmatprep.subr.bf16.mxu0 %v438
        %494 = vmatpush1.bf16.msra.mxu0 %v437
        %495 = vmatprep.subr.bf16.mxu0 %v442
        %496 = vmatpush1.bf16.msra.mxu0 %v441
        %497 = vmatprep.subr.bf16.mxu0 %v446
        %498 = vmatpush1.bf16.msra.mxu0 %v445
        %499 = vmatprep.subr.bf16.mxu0 %v450
        %500 = vmatpush1.bf16.msra.mxu0 %v449
        %501 = vmatprep.subr.bf16.mxu0 0
        %502 = vmatpush1.bf16.msra.mxu0 0
        %503 = vmatprep.subr.bf16.mxu0 0
        %504 = vmatpush1.bf16.msra.mxu0 0
        %505 = vmatprep.subr.bf16.mxu0 0
        %506 = vmatpush1.bf16.msra.mxu0 0
        %507 = vmatprep.subr.bf16.mxu0 0
        %508 = vmatpush1.bf16.msra.mxu0 0
        %509 = vmatprep.subr.bf16.mxu0 0
        %510 = vmatpush1.bf16.msra.mxu0 0
        %511 = vmatprep.subr.bf16.mxu0 0
        %512 = vmatpush1.bf16.msra.mxu0 0
        %513 = vmatprep.subr.bf16.mxu0 0
        %514 = vmatpush1.bf16.msra.mxu0 0
        %515 = vmatprep.subr.bf16.mxu0 0
        %516 = vmatpush1.bf16.msra.mxu0 0
        %517 = vmatprep.mubr.bf16.mxu0 0
        %518 = vmatmul.mubr.bf16.gmra.mrb[0].mxu0 %v270
        %v519 = vpop.f32.mrb[0].mxu0
        %v520 = vadd.f32 %v308, %v519
        %v521 = vpop.f32.mrb[0].mxu0
        %v522 = vadd.f32 %v312, %v521
        %v523 = vpop.f32.mrb[0].mxu0
        %v524 = vpop.f32.mrb[0].mxu0
        %525 = vdwg.mxu0
        %526 = vmatprep.subr.bf16.mxu0 %v424
        %527 = vmatpush1.bf16.msra.mxu0 %v423
        %528 = vmatprep.subr.bf16.mxu0 %v428
        %529 = vmatpush1.bf16.msra.mxu0 %v427
        %530 = vmatprep.subr.bf16.mxu0 %v432
        %531 = vmatpush1.bf16.msra.mxu0 %v431
        %532 = vmatprep.subr.bf16.mxu0 %v436
        %533 = vmatpush1.bf16.msra.mxu0 %v435
        %534 = vmatprep.subr.bf16.mxu0 %v440
        %535 = vmatpush1.bf16.msra.mxu0 %v439
        %536 = vmatprep.subr.bf16.mxu0 %v444
        %537 = vmatpush1.bf16.msra.mxu0 %v443
        %538 = vmatprep.subr.bf16.mxu0 %v448
        %539 = vmatpush1.bf16.msra.mxu0 %v447
        %540 = vmatprep.subr.bf16.mxu0 %v452
        %541 = vmatpush1.bf16.msra.mxu0 %v451
        %542 = vmatprep.subr.bf16.mxu0 0
        %543 = vmatpush1.bf16.msra.mxu0 0
        %544 = vmatprep.subr.bf16.mxu0 0
        %545 = vmatpush1.bf16.msra.mxu0 0
        %546 = vmatprep.subr.bf16.mxu0 0
        %547 = vmatpush1.bf16.msra.mxu0 0
        %548 = vmatprep.subr.bf16.mxu0 0
        %549 = vmatpush1.bf16.msra.mxu0 0
        %550 = vmatprep.subr.bf16.mxu0 0
        %551 = vmatpush1.bf16.msra.mxu0 0
        %552 = vmatprep.subr.bf16.mxu0 0
        %553 = vmatpush1.bf16.msra.mxu0 0
        %554 = vmatprep.subr.bf16.mxu0 0
        %555 = vmatpush1.bf16.msra.mxu0 0
        %556 = vmatprep.subr.bf16.mxu0 0
        %557 = vmatpush1.bf16.msra.mxu0 0
        %558 = vmatprep.mubr.bf16.mxu0 0
        %559 = vmatmul.mubr.bf16.gmra.mrb[0].mxu0 %v270
        %v560 = vpop.f32.mrb[0].mxu0
        %v561 = vadd.f32 %v316, %v560
        %v562 = vpop.f32.mrb[0].mxu0
        %v563 = vadd.f32 %v320, %v562
        %v564 = vpop.f32.mrb[0].mxu0
        %v565 = vpop.f32.mrb[0].mxu0
        %566 = vdwg.mxu0
        %v567 = vand.u32 2147483647, %v520
        %v568 = vand.u32 2147483647, %v522
        %v569 = vand.u32 2147483647, %v561
        %v570 = vand.u32 2147483647, %v563
        %v571 = vmul.f32 %v567, 0.23164189
        %v572 = vmul.f32 %v568, 0.23164189
        %v573 = vmul.f32 %v569, 0.23164189
        %v574 = vmul.f32 %v570, 0.23164189
        %v575 = vadd.f32 %v571, 1.0
        %v576 = vadd.f32 %v572, 1.0
        %v577 = vadd.f32 %v573, 1.0
        %v578 = vadd.f32 %v574, 1.0
        %v579 = vrcp.pop %v575
        %v580 = vrcp.pop %v576
        %v581 = vrcp.pop %v577
        %v582 = vrcp.pop %v578
        %v583 = vmul.f32 %v579, 1.0614054
        %v584 = vmul.f32 %v580, 1.0614054
        %v585 = vmul.f32 %v581, 1.0614054
        %v586 = vmul.f32 %v582, 1.0614054
        %v587 = vadd.f32 %v583, -1.4531521
        %v588 = vadd.f32 %v584, -1.4531521
        %v589 = vadd.f32 %v585, -1.4531521
        %v590 = vadd.f32 %v586, -1.4531521
        %v591 = vmul.f32 %v587, %v579
        %v592 = vmul.f32 %v588, %v580
        %v593 = vmul.f32 %v589, %v581
        %v594 = vmul.f32 %v590, %v582
        %v595 = vadd.f32 %v591, 1.4214138
        %v596 = vadd.f32 %v592, 1.4214138
        %v597 = vadd.f32 %v593, 1.4214138
        %v598 = vadd.f32 %v594, 1.4214138
        %v599 = vmul.f32 %v595, %v579
        %v600 = vmul.f32 %v596, %v580
        %v601 = vmul.f32 %v597, %v581
        %v602 = vmul.f32 %v598, %v582
        %v603 = vadd.f32 %v599, -0.28449672
        %v604 = vadd.f32 %v600, -0.28449672
        %v605 = vadd.f32 %v601, -0.28449672
        %v606 = vadd.f32 %v602, -0.28449672
        %v607 = vmul.f32 %v603, %v579
        %v608 = vmul.f32 %v604, %v580
        %v609 = vmul.f32 %v605, %v581
        %v610 = vmul.f32 %v606, %v582
        %v611 = vadd.f32 %v607, 0.2548296
        %v612 = vadd.f32 %v608, 0.2548296
        %v613 = vadd.f32 %v609, 0.2548296
        %v614 = vadd.f32 %v610, 0.2548296
        %v615 = vmul.f32 %v611, %v579
        %v616 = vmul.f32 %v612, %v580
        %v617 = vmul.f32 %v613, %v581
        %v618 = vmul.f32 %v614, %v582
        %v619 = vmul.f32 %v520, -0.5
        %v620 = vmul.f32 %v522, -0.5
        %v621 = vmul.f32 %v561, -0.5
        %v622 = vmul.f32 %v563, -0.5
        %v623 = vmul.f32 %v619, %v520
        %v624 = vmul.f32 %v620, %v522
        %v625 = vmul.f32 %v621, %v561
        %v626 = vmul.f32 %v622, %v563
        %v627 = vmul.f32 %v623, 1.442695
        %v628 = vpow.pop %v627
        %v629 = vmul.f32 %v624, 1.442695
        %v630 = vpow.pop %v629
        %v631 = vmul.f32 %v625, 1.442695
        %v632 = vpow.pop %v631
        %v633 = vmul.f32 %v626, 1.442695
        %v634 = vpow.pop %v633
        %v635 = vmul.f32 %v615, %v628
        %v636 = vmul.f32 %v616, %v630
        %v637 = vmul.f32 %v617, %v632
        %v638 = vmul.f32 %v618, %v634
        %v639 = vsub.f32 1.0, %v635
        %v640 = vsub.f32 1.0, %v636
        %v641 = vsub.f32 1.0, %v637
        %v642 = vsub.f32 1.0, %v638
        %v643 = vmul.f32 %v567, %v639
        %v644 = vmul.f32 %v568, %v640
        %v645 = vmul.f32 %v569, %v641
        %v646 = vmul.f32 %v570, %v642
        %v647 = vadd.f32 %v520, %v643
        %v648 = vadd.f32 %v522, %v644
        %v649 = vadd.f32 %v561, %v645
        %v650 = vadd.f32 %v563, %v646
        %v651 = vmul.f32 %v647, 0.5
        %v652 = vmul.f32 %v648, 0.5
        %v653 = vmul.f32 %v649, 0.5
        %v654 = vmul.f32 %v650, 0.5
        %v655 = vpack.c.bf16 %v651, %v651
        %v656 = vpack.c.bf16 %v652, %v652
        %v657 = vpack.c.bf16 %v653, %v653
        %v658 = vpack.c.bf16 %v654, %v654
        %v659 = vld [vmem:[#allocation7] sm:$0xf]
        %v660 = vld [vmem:[#allocation7 + $0x4] sm:$0xf]
        %v661 = vld [vmem:[#allocation7 + $0x8] sm:$0xf]
        %v662 = vld [vmem:[#allocation7 + $0xc] sm:$0xf]
        %v663 = vld [vmem:[#allocation7 + $0x10] sm:$0xf]
        %v664 = vld [vmem:[#allocation7 + $0x14] sm:$0xf]
        %v665 = vld [vmem:[#allocation7 + $0x18] sm:$0xf]
        %v666 = vld [vmem:[#allocation7 + $0x1c] sm:$0xf]
        %v667 = vld [vmem:[#allocation7 + $0x20] sm:$0xf]
        %v668 = vld [vmem:[#allocation7 + $0x24] sm:$0xf]
        %v669 = vld [vmem:[#allocation7 + $0x28] sm:$0xf]
        %v670 = vld [vmem:[#allocation7 + $0x2c] sm:$0xf]
        %v671 = vld [vmem:[#allocation7 + $0x30] sm:$0xf]
        %v672 = vld [vmem:[#allocation7 + $0x34] sm:$0xf]
        %v673 = vld [vmem:[#allocation7 + $0x38] sm:$0xf]
        %v674 = vld [vmem:[#allocation7 + $0x3c] sm:$0xf]
        %v675 = vld [vmem:[#allocation7 + $0x40] sm:$0xf]
        %v676 = vld [vmem:[#allocation7 + $0x44] sm:$0xf]
        %v677 = vld [vmem:[#allocation7 + $0x48] sm:$0xf]
        %v678 = vld [vmem:[#allocation7 + $0x4c] sm:$0xf]
        %v679 = vld [vmem:[#allocation7 + $0x50] sm:$0xf]
        %v680 = vld [vmem:[#allocation7 + $0x54] sm:$0xf]
        %v681 = vld [vmem:[#allocation7 + $0x58] sm:$0xf]
        %v682 = vld [vmem:[#allocation7 + $0x5c] sm:$0xf]
        %v683 = vld [vmem:[#allocation7 + $0x60] sm:$0xf]
        %v684 = vld [vmem:[#allocation7 + $0x64] sm:$0xf]
        %v685 = vld [vmem:[#allocation7 + $0x68] sm:$0xf]
        %v686 = vld [vmem:[#allocation7 + $0x6c] sm:$0xf]
        %v687 = vld [vmem:[#allocation7 + $0x70] sm:$0xf]
        %v688 = vld [vmem:[#allocation7 + $0x74] sm:$0xf]
        %v689 = vld [vmem:[#allocation7 + $0x78] sm:$0xf]
        %v690 = vld [vmem:[#allocation7 + $0x7c] sm:$0xf]
        %v691 = vld [vmem:[#allocation7 + $0x80] sm:$0xf]
        %v692 = vld [vmem:[#allocation7 + $0x84] sm:$0xf]
        %v693 = vld [vmem:[#allocation7 + $0x88] sm:$0xf]
        %v694 = vld [vmem:[#allocation7 + $0x8c] sm:$0xf]
        %v695 = vld [vmem:[#allocation7 + $0x90] sm:$0xf]
        %v696 = vld [vmem:[#allocation7 + $0x94] sm:$0xf]
        %v697 = vld [vmem:[#allocation7 + $0x98] sm:$0xf]
        %v698 = vld [vmem:[#allocation7 + $0x9c] sm:$0xf]
        %v699 = vld [vmem:[#allocation7 + $0xa0] sm:$0xf]
        %v700 = vld [vmem:[#allocation7 + $0xa4] sm:$0xf]
        %v701 = vld [vmem:[#allocation7 + $0xa8] sm:$0xf]
        %v702 = vld [vmem:[#allocation7 + $0xac] sm:$0xf]
        %v703 = vld [vmem:[#allocation7 + $0xb0] sm:$0xf]
        %v704 = vld [vmem:[#allocation7 + $0xb4] sm:$0xf]
        %v705 = vld [vmem:[#allocation7 + $0xb8] sm:$0xf]
        %v706 = vld [vmem:[#allocation7 + $0xbc] sm:$0xf]
        %v707 = vld [vmem:[#allocation7 + $0xc0] sm:$0xf]
        %v708 = vld [vmem:[#allocation7 + $0xc4] sm:$0xf]
        %v709 = vld [vmem:[#allocation7 + $0xc8] sm:$0xf]
        %v710 = vld [vmem:[#allocation7 + $0xcc] sm:$0xf]
        %v711 = vld [vmem:[#allocation7 + $0xd0] sm:$0xf]
        %v712 = vld [vmem:[#allocation7 + $0xd4] sm:$0xf]
        %v713 = vld [vmem:[#allocation7 + $0xd8] sm:$0xf]
        %v714 = vld [vmem:[#allocation7 + $0xdc] sm:$0xf]
        %v715 = vld [vmem:[#allocation7 + $0xe0] sm:$0xf]
        %v716 = vld [vmem:[#allocation7 + $0xe4] sm:$0xf]
        %v717 = vld [vmem:[#allocation7 + $0xe8] sm:$0xf]
        %v718 = vld [vmem:[#allocation7 + $0xec] sm:$0xf]
        %v719 = vld [vmem:[#allocation7 + $0xf0] sm:$0xf]
        %v720 = vld [vmem:[#allocation7 + $0xf4] sm:$0xf]
        %v721 = vld [vmem:[#allocation7 + $0xf8] sm:$0xf]
        %v722 = vld [vmem:[#allocation7 + $0xfc] sm:$0xf]
        %v723 = vld [vmem:[%s4] sm:$0x1]
        %v725 = vlaneseq
        %v726 = vshrl.u32 %v725, 7
        %v727 = vsub.s32 0, %v726
        %v728 = vrot.slane %v723, %v727
        %v794 = vunpack.c.l.b16 %v659
        %v795 = vunpack.c.l.b16 %v660
        %v796 = vunpack.c.l.b16 %v661
        %v797 = vunpack.c.l.b16 %v662
        %v798 = vunpack.c.l.b16 %v663
        %v799 = vunpack.c.l.b16 %v664
        %v800 = vunpack.c.l.b16 %v665
        %v801 = vunpack.c.l.b16 %v666
        %v802 = vunpack.c.l.b16 %v667
        %v803 = vunpack.c.l.b16 %v668
        %v804 = vunpack.c.l.b16 %v669
        %v805 = vunpack.c.l.b16 %v670
        %v806 = vunpack.c.l.b16 %v671
        %v807 = vunpack.c.l.b16 %v672
        %v808 = vunpack.c.l.b16 %v673
        %v809 = vunpack.c.l.b16 %v674
        %v810 = vunpack.c.l.b16 %v675
        %v811 = vunpack.c.l.b16 %v676
        %v812 = vunpack.c.l.b16 %v677
        %v813 = vunpack.c.l.b16 %v678
        %v814 = vunpack.c.l.b16 %v679
        %v815 = vunpack.c.l.b16 %v680
        %v816 = vunpack.c.l.b16 %v681
        %v817 = vunpack.c.l.b16 %v682
        %v818 = vunpack.c.l.b16 %v683
        %v819 = vunpack.c.l.b16 %v684
        %v820 = vunpack.c.l.b16 %v685
        %v821 = vunpack.c.l.b16 %v686
        %v822 = vunpack.c.l.b16 %v687
        %v823 = vunpack.c.l.b16 %v688
        %v824 = vunpack.c.l.b16 %v689
        %v825 = vunpack.c.l.b16 %v690
        %v826 = vunpack.c.l.b16 %v691
        %v827 = vunpack.c.l.b16 %v692
        %v828 = vunpack.c.l.b16 %v693
        %v829 = vunpack.c.l.b16 %v694
        %v830 = vunpack.c.l.b16 %v695
        %v831 = vunpack.c.l.b16 %v696
        %v832 = vunpack.c.l.b16 %v697
        %v833 = vunpack.c.l.b16 %v698
        %v834 = vunpack.c.l.b16 %v699
        %v835 = vunpack.c.l.b16 %v700
        %v836 = vunpack.c.l.b16 %v701
        %v837 = vunpack.c.l.b16 %v702
        %v838 = vunpack.c.l.b16 %v703
        %v839 = vunpack.c.l.b16 %v704
        %v840 = vunpack.c.l.b16 %v705
        %v841 = vunpack.c.l.b16 %v706
        %v842 = vunpack.c.l.b16 %v707
        %v843 = vunpack.c.l.b16 %v708
        %v844 = vunpack.c.l.b16 %v709
        %v845 = vunpack.c.l.b16 %v710
        %v846 = vunpack.c.l.b16 %v711
        %v847 = vunpack.c.l.b16 %v712
        %v848 = vunpack.c.l.b16 %v713
        %v849 = vunpack.c.l.b16 %v714
        %v850 = vunpack.c.l.b16 %v715
        %v851 = vunpack.c.l.b16 %v716
        %v852 = vunpack.c.l.b16 %v717
        %v853 = vunpack.c.l.b16 %v718
        %v854 = vunpack.c.l.b16 %v719
        %v855 = vunpack.c.l.b16 %v720
        %v856 = vunpack.c.l.b16 %v721
        %v857 = vunpack.c.l.b16 %v722
        %v858 = vpack.c.b16 %v795, %v794
        %v859 = vpack.c.b16 %v797, %v796
        %v860 = vpack.c.b16 %v799, %v798
        %v861 = vpack.c.b16 %v801, %v800
        %v862 = vpack.c.b16 %v803, %v802
        %v863 = vpack.c.b16 %v805, %v804
        %v864 = vpack.c.b16 %v807, %v806
        %v865 = vpack.c.b16 %v809, %v808
        %v866 = vpack.c.b16 %v811, %v810
        %v867 = vpack.c.b16 %v813, %v812
        %v868 = vpack.c.b16 %v815, %v814
        %v869 = vpack.c.b16 %v817, %v816
        %v870 = vpack.c.b16 %v819, %v818
        %v871 = vpack.c.b16 %v821, %v820
        %v872 = vpack.c.b16 %v823, %v822
        %v873 = vpack.c.b16 %v825, %v824
        %v874 = vpack.c.b16 %v827, %v826
        %v875 = vpack.c.b16 %v829, %v828
        %v876 = vpack.c.b16 %v831, %v830
        %v877 = vpack.c.b16 %v833, %v832
        %v878 = vpack.c.b16 %v835, %v834
        %v879 = vpack.c.b16 %v837, %v836
        %v880 = vpack.c.b16 %v839, %v838
        %v881 = vpack.c.b16 %v841, %v840
        %v882 = vpack.c.b16 %v843, %v842
        %v883 = vpack.c.b16 %v845, %v844
        %v884 = vpack.c.b16 %v847, %v846
        %v885 = vpack.c.b16 %v849, %v848
        %v886 = vpack.c.b16 %v851, %v850
        %v887 = vpack.c.b16 %v853, %v852
        %v888 = vpack.c.b16 %v855, %v854
        %v889 = vpack.c.b16 %v857, %v856
        %922 = vmatprep.subr.bf16.mxu0 0
        %923 = vmatpush1.bf16.msra.mxu0 %v858
        %924 = vmatprep.subr.bf16.mxu0 0
        %925 = vmatpush1.bf16.msra.mxu0 %v859
        %926 = vmatprep.subr.bf16.mxu0 0
        %927 = vmatpush1.bf16.msra.mxu0 %v860
        %928 = vmatprep.subr.bf16.mxu0 0
        %929 = vmatpush1.bf16.msra.mxu0 %v861
        %930 = vmatprep.subr.bf16.mxu0 0
        %931 = vmatpush1.bf16.msra.mxu0 %v862
        %932 = vmatprep.subr.bf16.mxu0 0
        %933 = vmatpush1.bf16.msra.mxu0 %v863
        %934 = vmatprep.subr.bf16.mxu0 0
        %935 = vmatpush1.bf16.msra.mxu0 %v864
        %936 = vmatprep.subr.bf16.mxu0 0
        %937 = vmatpush1.bf16.msra.mxu0 %v865
        %938 = vmatprep.subr.bf16.mxu0 0
        %939 = vmatpush1.bf16.msra.mxu0 %v866
        %940 = vmatprep.subr.bf16.mxu0 0
        %941 = vmatpush1.bf16.msra.mxu0 %v867
        %942 = vmatprep.subr.bf16.mxu0 0
        %943 = vmatpush1.bf16.msra.mxu0 %v868
        %944 = vmatprep.subr.bf16.mxu0 0
        %945 = vmatpush1.bf16.msra.mxu0 %v869
        %946 = vmatprep.subr.bf16.mxu0 0
        %947 = vmatpush1.bf16.msra.mxu0 %v870
        %948 = vmatprep.subr.bf16.mxu0 0
        %949 = vmatpush1.bf16.msra.mxu0 %v871
        %950 = vmatprep.subr.bf16.mxu0 0
        %951 = vmatpush1.bf16.msra.mxu0 %v872
        %952 = vmatprep.subr.bf16.mxu0 0
        %953 = vmatpush1.bf16.msra.mxu0 %v873
        %954 = vmatprep.mubr.bf16.mxu0 %v656
        %955 = vmatmul.mubr.bf16.gmra.mrb[0].mxu0 %v655
        %v956 = vpop.f32.mrb[0].mxu0
        %v957 = vadd.f32 %v728, %v956
        %v958 = vpop.f32.mrb[0].mxu0
        %v959 = vpop.f32.mrb[0].mxu0
        %v960 = vpop.f32.mrb[0].mxu0
        %961 = vdwg.mxu0
        %962 = vmatprep.subr.bf16.mxu0 0
        %963 = vmatpush1.bf16.msra.mxu0 %v874
        %964 = vmatprep.subr.bf16.mxu0 0
        %965 = vmatpush1.bf16.msra.mxu0 %v875
        %966 = vmatprep.subr.bf16.mxu0 0
        %967 = vmatpush1.bf16.msra.mxu0 %v876
        %968 = vmatprep.subr.bf16.mxu0 0
        %969 = vmatpush1.bf16.msra.mxu0 %v877
        %970 = vmatprep.subr.bf16.mxu0 0
        %971 = vmatpush1.bf16.msra.mxu0 %v878
        %972 = vmatprep.subr.bf16.mxu0 0
        %973 = vmatpush1.bf16.msra.mxu0 %v879
        %974 = vmatprep.subr.bf16.mxu0 0
        %975 = vmatpush1.bf16.msra.mxu0 %v880
        %976 = vmatprep.subr.bf16.mxu0 0
        %977 = vmatpush1.bf16.msra.mxu0 %v881
        %978 = vmatprep.subr.bf16.mxu0 0
        %979 = vmatpush1.bf16.msra.mxu0 %v882
        %980 = vmatprep.subr.bf16.mxu0 0
        %981 = vmatpush1.bf16.msra.mxu0 %v883
        %982 = vmatprep.subr.bf16.mxu0 0
        %983 = vmatpush1.bf16.msra.mxu0 %v884
        %984 = vmatprep.subr.bf16.mxu0 0
        %985 = vmatpush1.bf16.msra.mxu0 %v885
        %986 = vmatprep.subr.bf16.mxu0 0
        %987 = vmatpush1.bf16.msra.mxu0 %v886
        %988 = vmatprep.subr.bf16.mxu0 0
        %989 = vmatpush1.bf16.msra.mxu0 %v887
        %990 = vmatprep.subr.bf16.mxu0 0
        %991 = vmatpush1.bf16.msra.mxu0 %v888
        %992 = vmatprep.subr.bf16.mxu0 0
        %993 = vmatpush1.bf16.msra.mxu0 %v889
        %994 = vmatprep.mubr.bf16.mxu0 %v658
        %995 = vmatmul.mubr.bf16.gmra.mrb[0].mxu0 %v657
        %v996 = vpop.f32.mrb[0].mxu0
        %v997 = vadd.f32 %v957, %v996
        %v998 = vpop.f32.mrb[0].mxu0
        %v999 = vpop.f32.mrb[0].mxu0
        %v1000 = vpop.f32.mrb[0].mxu0
        %1001 = vdwg.mxu0
        %1002 = vst [vmem:[%s268] sm:$0xff] %v997
        %s1003 = sand.u32 %s141, 1
        %s1004 = scalar_lea.sflag [#allocation4], %s1003
        %s1005 = sand.u32 %s141, 1
        %s1006 = smul.addr %s1005, 8
        %s1007 = scalar_lea.vmem [#allocation8], %s1006
        // Predicated region
        $region53: #{tpu_custom_call.1} parent=39 // pred_check
          %p1008 = pneg %p151
        $region54: #{tpu_custom_call.1} parent=39 // pred_check_branch
          %1010 = sbr.rel (%p1008) target = $region56
        $region55: #{tpu_custom_call.1} parent=39 // pred_region
          %s1012 = ssub.s32 128, 128
          %1013 = vsyncadd %s1004, %s1012
          %s1014 = smul.addr %s23, 128
          %s1015 = scalar_lea.hbm %s5, %s1014
          %s1017 = sshll.u32 %s1007, 4
          %s1018 = int_to_ptr.vmem [resolvable:$true] %s1017
          %1020 = dma.vmem_to_hbm [thread:$0]  %s1018, 128, %s1015, %s1004
        $region56: #{tpu_custom_call.1} parent=39 // pred_fallthru
          _
      $region40: #{tpu_custom_call.1} parent=5 // pred_fallthru
        _
      %p1021 = scmp.le.s32.totalorder 2, %s18
      // Predicated region
      $region57: #{tpu_custom_call.1} parent=5 // pred_check
        %p1022 = pneg %p1021
      $region58: #{tpu_custom_call.1} parent=5 // pred_check_branch
        %1024 = sbr.rel (%p1022) target = $region60
      $region59: #{tpu_custom_call.1} parent=5 // pred_region
        %s1025 = ssub.s32 %s18, 2
        // Predicated region
        $region61: #{tpu_custom_call.1} parent=59 // pred_check
          %p1026 = pneg %p157
        $region62: #{tpu_custom_call.1} parent=59 // pred_check_branch
          %1028 = sbr.rel (%p1026) target = $region64
        $region63: #{tpu_custom_call.1} parent=59 // pred_region
          %s1029 = sand.u32 %s142, 1
          %s1030 = scalar_lea.sflag [#allocation4], %s1029
          %s1031 = sand.u32 %s142, 1
          %s1032 = smul.addr %s1031, 8
          %s1033 = scalar_lea.vmem [#allocation8], %s1032
          %1034 = dma.done %s1030, 128
        $region64: #{tpu_custom_call.1} parent=59 // pred_fallthru
          _
      $region60: #{tpu_custom_call.1} parent=5 // pred_fallthru
        _
    $region6: #{tpu_custom_call.1} parent=1 // loop_footer
      %s22 = sadd.s32 1, %s18
    $region7: #{tpu_custom_call.1} parent=1 // loop_footer_branch
      %17 = sbr.rel target = $region3
    $region8: #{tpu_custom_call.1} parent=1 // loop_exit
      _
    %1035 = vsyncpa [#allocation3], 1
    %s1036 = scalar_lea.sflag [#allocation3], 1
    %1037 = vsyncpa %s1036, 1
    %1038 = vsyncpa [#allocation6], 1
    %1039 = vsyncpa [#allocation4], 1
    %s1040 = scalar_lea.sflag [#allocation4], 1
    %1041 = vsyncpa %s1040, 1

</llo_original>
